<compile_context>
chip_gen: v5e
topology: v5e:2x2
jax: 0.10.0
libtpu: 0.0.40
codegen_flags: <defaults>
</compile_context>

<pallas_src>
import jax
import jax.numpy as jnp
from jax import lax
from jax.experimental import pallas as pl
from jax.experimental.pallas import tpu as pltpu

# -------------------- problem sizes --------------------
BATCH = 2
SEQ = 8
EMB = 16
HID = 32
VOCAB = 32          # input vocab == output vocab == decoder.output_size


def _vmem():
    return pl.BlockSpec(memory_space=pltpu.MemorySpace.VMEM)


# -------------------- fused Pallas kernel --------------------
def seq2seq_kernel(enc_x_ref, enc_w_ih_ref, enc_b_ref, enc_w_hh_ref,
                   enc_w_lin_ref, enc_b_lin_ref,
                   dec_xproj0_ref, dec_emb_proj_ref, dec_w_hh_ref,
                   dec_w_out_ref, dec_b_out_ref,
                   out_ref):
    """Encoder RNN + linear/tanh + full greedy decode, single invocation.

    enc_x_ref       : (S*Bp, E) bf16  time-major embedded source (row = t*Bp+b)
    enc_b_ref       : (1, H)    f32   fused encoder bias (b_ih + b_hh)
    dec_xproj0_ref  : (Bp, H)   f32   dec_emb[source[:,0]] @ w_ih + bias
    dec_emb_proj_ref: (V, H)    bf16  dec_emb @ w_ih + bias (pre-projected)
    dec_b_out_ref   : (Bp, V)   f32   pre-broadcast output bias
    out_ref         : (S, Bp, V) f32  RAW logits per step (log_softmax deferred)
    """
    S, Bp, V = out_ref.shape
    H = enc_w_hh_ref.shape[0]
    f32 = jnp.float32
    bf16 = jnp.bfloat16

    # ---------------- encoder ----------------
    # Hoisted input projection: one batched matmul off the serial recurrence.
    # Kept as a register value (S*Bp, H) ~ a handful of vregs, no VMEM bounce.
    xproj_all = (jnp.dot(enc_x_ref[...], enc_w_ih_ref[...],
                         preferred_element_type=f32)
                 + enc_b_ref[...])                               # (S*Bp, H)

    w_hh_e = enc_w_hh_ref[...]
    h = jnp.zeros((Bp, H), f32)
    for t in range(S):                                           # unrolled
        xp = xproj_all[t * Bp:(t + 1) * Bp, :]                   # aligned vreg slice
        h = jnp.tanh(xp + jnp.dot(h.astype(bf16), w_hh_e,
                                  preferred_element_type=f32))

    h = jnp.tanh(jnp.dot(h.astype(bf16), enc_w_lin_ref[...],
                         preferred_element_type=f32)
                 + enc_b_lin_ref[...])                           # (Bp, H)

    # ---------------- greedy decoder ----------------
    emb_proj = dec_emb_proj_ref[...]                             # (V, H) bf16, bias folded
    w_hh_d = dec_w_hh_ref[...]                                   # (H, H) bf16
    w_out = dec_w_out_ref[...]                                   # (H, V) bf16
    b_out = dec_b_out_ref[...]                                   # (Bp, V) f32, pre-broadcast
    lane = lax.broadcasted_iota(jnp.int32, (Bp, V), 1)

    xproj = dec_xproj0_ref[...]                                  # (Bp, H) f32
    for t in range(S):                                           # unrolled decode loop
        h = jnp.tanh(xproj + jnp.dot(h.astype(bf16), w_hh_d,
                                     preferred_element_type=f32))
        logits = (jnp.dot(h.astype(bf16), w_out,
                          preferred_element_type=f32) + b_out)   # (Bp, V)

        # raw logits straight to the output tile (static index, off the chain)
        out_ref[t, :, :] = logits

        if t + 1 < S:
            # greedy feedback: first-occurrence argmax on raw logits, then
            # one-hot @ pre-projected embedding (pure vector/MXU "gather").
            m = jnp.max(logits, axis=-1, keepdims=True)
            amax = jnp.min(jnp.where(logits == m, lane, V),
                           axis=-1, keepdims=True)
            onehot = (lane == amax).astype(f32)                  # VPU select (f32)
            xproj = jnp.dot(onehot.astype(bf16), emb_proj,
                            preferred_element_type=f32)          # (Bp, H)


# -------------------- wrapper --------------------
def seq2seq_forward(params, source, out_seq_len=None):
    """source: (batch, seq) int32 token ids -> (batch, out_seq_len, VOCAB)."""
    B, S = source.shape
    if out_seq_len is None:
        out_seq_len = S

    E = params["enc_emb"].shape[1]
    H = params["enc_w_hh"].shape[0]
    V = params["dec_emb"].shape[0]
    Bp = max(8, -(-B // 8) * 8)          # pad batch to a full sublane group

    f32 = jnp.float32
    bf16 = jnp.bfloat16

    # Pre-embed source tokens (XLA gathers BEFORE the single kernel launch).
    enc_x = jnp.take(params["enc_emb"], source, axis=0).astype(f32)       # (B,S,E)
    enc_x = jnp.transpose(enc_x, (1, 0, 2))                               # (S,B,E)
    enc_x = jnp.pad(enc_x, ((0, 0), (0, Bp - B), (0, 0))).reshape(S * Bp, E)
    dec_x0 = jnp.take(params["dec_emb"], source[:, 0], axis=0).astype(f32)
    dec_x0 = jnp.pad(dec_x0, ((0, Bp - B), (0, 0)))                       # (Bp,E)

    # One-time pre-fusion / pre-projection (outside the kernel).
    enc_b = (params["enc_b_ih"] + params["enc_b_hh"]).astype(f32)         # (1,H)
    dec_b = (params["dec_b_ih"] + params["dec_b_hh"]).astype(f32)         # (1,H)
    emb_proj = (jnp.dot(params["dec_emb"], params["dec_w_ih"])
                + dec_b).astype(bf16)                                     # (V,H)
    xproj0 = (jnp.dot(dec_x0, params["dec_w_ih"]) + dec_b).astype(f32)    # (Bp,H)
    b_out = jnp.broadcast_to(params["dec_b_out"].astype(f32), (Bp, V))

    out_logits = pl.pallas_call(
        seq2seq_kernel,
        out_shape=jax.ShapeDtypeStruct((S, Bp, V), f32),
        in_specs=[_vmem()] * 11,
        out_specs=_vmem(),
    )(enc_x.astype(bf16),
      params["enc_w_ih"].astype(bf16), enc_b,
      params["enc_w_hh"].astype(bf16),
      params["enc_w_lin"].astype(bf16), params["enc_b_lin"].astype(f32),
      xproj0, emb_proj,
      params["dec_w_hh"].astype(bf16), params["dec_w_out"].astype(bf16),
      b_out)

    # Deferred log_softmax: one vectorized pass in XLA, off the serial chain.
    logits = jnp.transpose(out_logits, (1, 0, 2))[:B]                     # (B,S,V)
    result = jax.nn.log_softmax(logits, axis=-1)
    if out_seq_len > S:
        # Original torch module leaves un-decoded positions as zeros.
        pad = jnp.zeros((B, out_seq_len - S, V), f32)
        result = jnp.concatenate([result, pad], axis=1)
    return result


# -------------------- pure-JAX references --------------------
def reference_first_step(params, source):
    """Pure-f32 (HIGHEST precision) encoder + first decoder step."""
    B, S = source.shape
    hi = lax.Precision.HIGHEST
    x = jnp.take(params["enc_emb"], source, axis=0).astype(jnp.float32)
    h = jnp.zeros((B, params["enc_w_hh"].shape[0]), jnp.float32)
    for t in range(S):
        pre = (jnp.dot(x[:, t, :], params["enc_w_ih"], precision=hi)
               + params["enc_b_ih"]
               + jnp.dot(h, params["enc_w_hh"], precision=hi)
               + params["enc_b_hh"])
        h = jnp.tanh(pre)
    h = jnp.tanh(jnp.dot(h, params["enc_w_lin"], precision=hi)
                 + params["enc_b_lin"])
    xe = jnp.take(params["dec_emb"], source[:, 0], axis=0).astype(jnp.float32)
    pre = (jnp.dot(xe, params["dec_w_ih"], precision=hi) + params["dec_b_ih"]
           + jnp.dot(h, params["dec_w_hh"], precision=hi) + params["dec_b_hh"])
    h = jnp.tanh(pre)
    logits = jnp.dot(h, params["dec_w_out"], precision=hi) + params["dec_b_out"]
    return jax.nn.log_softmax(logits, axis=-1)


def reference_all_steps(params, source, fed_tokens):
    """Matched-precision (bf16 MXU operands, f32 accumulate) reference for ALL
    decode steps.  The greedy feedback tokens are supplied externally (taken
    from the kernel's own logits) so the check is robust to sub-ulp
    tie-breaking, while still validating the encoder, every decoder-cell step,
    the output head and the feedback-embedding path."""
    B, S = source.shape
    H = params["enc_w_hh"].shape[0]
    f32, bf16 = jnp.float32, jnp.bfloat16

    enc_b = params["enc_b_ih"] + params["enc_b_hh"]
    dec_b = params["dec_b_ih"] + params["dec_b_hh"]
    emb_proj = (jnp.dot(params["dec_emb"], params["dec_w_ih"]) + dec_b).astype(bf16)

    w_ih_e = params["enc_w_ih"].astype(bf16)
    w_hh_e = params["enc_w_hh"].astype(bf16)
    w_lin = params["enc_w_lin"].astype(bf16)
    w_hh_d = params["dec_w_hh"].astype(bf16)
    w_out = params["dec_w_out"].astype(bf16)

    x = jnp.take(params["enc_emb"], source, axis=0).astype(f32)
    h = jnp.zeros((B, H), f32)
    for t in range(S):
        xp = jnp.dot(x[:, t, :].astype(bf16), w_ih_e,
                     preferred_element_type=f32) + enc_b
        h = jnp.tanh(xp + jnp.dot(h.astype(bf16), w_hh_e,
                                  preferred_element_type=f32))
    h = jnp.tanh(jnp.dot(h.astype(bf16), w_lin, preferred_element_type=f32)
                 + params["enc_b_lin"])

    dec_x0 = jnp.take(params["dec_emb"], source[:, 0], axis=0).astype(f32)
    xproj = jnp.dot(dec_x0, params["dec_w_ih"]) + dec_b
    outs = []
    for t in range(S):
        h = jnp.tanh(xproj + jnp.dot(h.astype(bf16), w_hh_d,
                                     preferred_element_type=f32))
        logits = (jnp.dot(h.astype(bf16), w_out, preferred_element_type=f32)
                  + params["dec_b_out"])
        outs.append(jax.nn.log_softmax(logits, axis=-1))
        if t + 1 < S:
            xproj = jnp.take(emb_proj, fed_tokens[:, t], axis=0).astype(f32)
    return jnp.stack(outs, axis=1)


# -------------------- deterministic parameter init --------------------
def init_params(key):
    ks = jax.random.split(key, 12)
    s = 0.1
    return {
        # encoder
        "enc_emb":   s * jax.random.normal(ks[0], (VOCAB, EMB), jnp.float32),
        "enc_w_ih":  s * jax.random.normal(ks[1], (EMB, HID), jnp.float32),
        "enc_b_ih":  s * jax.random.normal(ks[2], (1, HID), jnp.float32),
        "enc_w_hh":  s * jax.random.normal(ks[3], (HID, HID), jnp.float32),
        "enc_b_hh":  s * jax.random.normal(ks[4], (1, HID), jnp.float32),
        "enc_w_lin": s * jax.random.normal(ks[5], (HID, HID), jnp.float32),
        "enc_b_lin": s * jax.random.normal(ks[6], (1, HID), jnp.float32),
        # decoder
        "dec_emb":   s * jax.random.normal(ks[7], (VOCAB, EMB), jnp.float32),
        "dec_w_ih":  s * jax.random.normal(ks[8], (EMB, HID), jnp.float32),
        "dec_b_ih":  s * jax.random.normal(ks[9], (1, HID), jnp.float32),
        "dec_w_hh":  s * jax.random.normal(ks[10], (HID, HID), jnp.float32),
        "dec_b_hh":  jnp.zeros((1, HID), jnp.float32),
        "dec_w_out": s * jax.random.normal(ks[11], (HID, VOCAB), jnp.float32),
        "dec_b_out": jnp.zeros((1, VOCAB), jnp.float32),
    }


if __name__ == "__main__":
    key = jax.random.PRNGKey(0)
    pkey, skey = jax.random.split(key)
    params = init_params(pkey)
    source = jax.random.randint(skey, (BATCH, SEQ), 0, VOCAB, dtype=jnp.int32)

    out = jax.block_until_ready(seq2seq_forward(params, source))

    assert out.shape == (BATCH, SEQ, VOCAB), out.shape
    assert bool(jnp.all(jnp.isfinite(out)))
    # every decoded row is a valid log_softmax distribution
    assert bool(jnp.allclose(jnp.sum(jnp.exp(out), axis=-1), 1.0, atol=1e-4))

    # step-0 check against a pure-f32 HIGHEST-precision reference
    ref0 = reference_first_step(params, source)
    assert bool(jnp.allclose(out[:, 0, :], ref0, atol=2e-2, rtol=2e-2))

    # all-steps check against a matched-precision reference (greedy feedback
    # tokens taken from the kernel's own logits -> robust to tie-break ulps,
    # but validates every step of the recurrence and the feedback embedding).
    fed_tokens = jnp.argmax(out, axis=-1)                    # (B, S)
    ref_all = reference_all_steps(params, source, fed_tokens)
    assert bool(jnp.allclose(out, ref_all, atol=1e-2, rtol=1e-2))

    print("KERNEL_OK")
</pallas_src>

<mosaic_0001>
module attributes {stable_mosaic.version = 11 : i64} {
  func.func @seq2seq_kernel(%arg0: memref<64x16xbf16, #tpu.memory_space<vmem>>, %arg1: memref<16x32xbf16, #tpu.memory_space<vmem>>, %arg2: memref<1x32xf32, #tpu.memory_space<vmem>>, %arg3: memref<32x32xbf16, #tpu.memory_space<vmem>>, %arg4: memref<32x32xbf16, #tpu.memory_space<vmem>>, %arg5: memref<1x32xf32, #tpu.memory_space<vmem>>, %arg6: memref<8x32xf32, #tpu.memory_space<vmem>>, %arg7: memref<32x32xbf16, #tpu.memory_space<vmem>>, %arg8: memref<32x32xbf16, #tpu.memory_space<vmem>>, %arg9: memref<32x32xbf16, #tpu.memory_space<vmem>>, %arg10: memref<8x32xf32, #tpu.memory_space<vmem>>, %arg11: memref<8x8x32xf32, #tpu.memory_space<vmem>>) attributes {dimension_semantics = [], scalar_prefetch = 0 : i64, scratch_operands = 0 : i64, tpu.core_type = #tpu.core_type<tc>} {
    %c0 = arith.constant 0 : index
    %c0_0 = arith.constant 0 : index
    %0 = vector.load %arg0[%c0, %c0_0] : memref<64x16xbf16, #tpu.memory_space<vmem>>, vector<64x16xbf16>
    %c0_1 = arith.constant 0 : index
    %c0_2 = arith.constant 0 : index
    %1 = vector.load %arg1[%c0_1, %c0_2] : memref<16x32xbf16, #tpu.memory_space<vmem>>, vector<16x32xbf16>
    %cst = arith.constant dense<0.000000e+00> : vector<64x32xf32>
    %2 = tpu.matmul %0, %1, %cst {dimension_numbers = #tpu.dot_dimension_numbers<[1], [0], [0], [1], [0, 0, 1, 1], [], []>} : vector<64x16xbf16>, vector<16x32xbf16>, vector<64x32xf32> -> vector<64x32xf32>
    %c0_3 = arith.constant 0 : index
    %c0_4 = arith.constant 0 : index
    %3 = vector.load %arg2[%c0_3, %c0_4] : memref<1x32xf32, #tpu.memory_space<vmem>>, vector<1x32xf32>
    %4 = vector.broadcast %3 : vector<1x32xf32> to vector<64x32xf32>
    %5 = arith.addf %2, %4 : vector<64x32xf32>
    %c0_5 = arith.constant 0 : index
    %c0_6 = arith.constant 0 : index
    %6 = vector.load %arg3[%c0_5, %c0_6] : memref<32x32xbf16, #tpu.memory_space<vmem>>, vector<32x32xbf16>
    %cst_7 = arith.constant 0.000000e+00 : f32
    %7 = vector.broadcast %cst_7 : f32 to vector<8x32xf32>
    %8 = vector.extract_strided_slice %5 {offsets = [0, 0], sizes = [8, 32], strides = [1, 1]} : vector<64x32xf32> to vector<8x32xf32>
    %9 = arith.truncf %7 : vector<8x32xf32> to vector<8x32xbf16>
    %cst_8 = arith.constant dense<0.000000e+00> : vector<8x32xf32>
    %10 = tpu.matmul %9, %6, %cst_8 {dimension_numbers = #tpu.dot_dimension_numbers<[1], [0], [0], [1], [0, 0, 1, 1], [], []>} : vector<8x32xbf16>, vector<32x32xbf16>, vector<8x32xf32> -> vector<8x32xf32>
    %11 = arith.addf %8, %10 : vector<8x32xf32>
    %12 = math.tanh %11 : vector<8x32xf32>
    %13 = vector.extract_strided_slice %5 {offsets = [8, 0], sizes = [8, 32], strides = [1, 1]} : vector<64x32xf32> to vector<8x32xf32>
    %14 = arith.truncf %12 : vector<8x32xf32> to vector<8x32xbf16>
    %cst_9 = arith.constant dense<0.000000e+00> : vector<8x32xf32>
    %15 = tpu.matmul %14, %6, %cst_9 {dimension_numbers = #tpu.dot_dimension_numbers<[1], [0], [0], [1], [0, 0, 1, 1], [], []>} : vector<8x32xbf16>, vector<32x32xbf16>, vector<8x32xf32> -> vector<8x32xf32>
    %16 = arith.addf %13, %15 : vector<8x32xf32>
    %17 = math.tanh %16 : vector<8x32xf32>
    %18 = vector.extract_strided_slice %5 {offsets = [16, 0], sizes = [8, 32], strides = [1, 1]} : vector<64x32xf32> to vector<8x32xf32>
    %19 = arith.truncf %17 : vector<8x32xf32> to vector<8x32xbf16>
    %cst_10 = arith.constant dense<0.000000e+00> : vector<8x32xf32>
    %20 = tpu.matmul %19, %6, %cst_10 {dimension_numbers = #tpu.dot_dimension_numbers<[1], [0], [0], [1], [0, 0, 1, 1], [], []>} : vector<8x32xbf16>, vector<32x32xbf16>, vector<8x32xf32> -> vector<8x32xf32>
    %21 = arith.addf %18, %20 : vector<8x32xf32>
    %22 = math.tanh %21 : vector<8x32xf32>
    %23 = vector.extract_strided_slice %5 {offsets = [24, 0], sizes = [8, 32], strides = [1, 1]} : vector<64x32xf32> to vector<8x32xf32>
    %24 = arith.truncf %22 : vector<8x32xf32> to vector<8x32xbf16>
    %cst_11 = arith.constant dense<0.000000e+00> : vector<8x32xf32>
    %25 = tpu.matmul %24, %6, %cst_11 {dimension_numbers = #tpu.dot_dimension_numbers<[1], [0], [0], [1], [0, 0, 1, 1], [], []>} : vector<8x32xbf16>, vector<32x32xbf16>, vector<8x32xf32> -> vector<8x32xf32>
    %26 = arith.addf %23, %25 : vector<8x32xf32>
    %27 = math.tanh %26 : vector<8x32xf32>
    %28 = vector.extract_strided_slice %5 {offsets = [32, 0], sizes = [8, 32], strides = [1, 1]} : vector<64x32xf32> to vector<8x32xf32>
    %29 = arith.truncf %27 : vector<8x32xf32> to vector<8x32xbf16>
    %cst_12 = arith.constant dense<0.000000e+00> : vector<8x32xf32>
    %30 = tpu.matmul %29, %6, %cst_12 {dimension_numbers = #tpu.dot_dimension_numbers<[1], [0], [0], [1], [0, 0, 1, 1], [], []>} : vector<8x32xbf16>, vector<32x32xbf16>, vector<8x32xf32> -> vector<8x32xf32>
    %31 = arith.addf %28, %30 : vector<8x32xf32>
    %32 = math.tanh %31 : vector<8x32xf32>
    %33 = vector.extract_strided_slice %5 {offsets = [40, 0], sizes = [8, 32], strides = [1, 1]} : vector<64x32xf32> to vector<8x32xf32>
    %34 = arith.truncf %32 : vector<8x32xf32> to vector<8x32xbf16>
    %cst_13 = arith.constant dense<0.000000e+00> : vector<8x32xf32>
    %35 = tpu.matmul %34, %6, %cst_13 {dimension_numbers = #tpu.dot_dimension_numbers<[1], [0], [0], [1], [0, 0, 1, 1], [], []>} : vector<8x32xbf16>, vector<32x32xbf16>, vector<8x32xf32> -> vector<8x32xf32>
    %36 = arith.addf %33, %35 : vector<8x32xf32>
    %37 = math.tanh %36 : vector<8x32xf32>
    %38 = vector.extract_strided_slice %5 {offsets = [48, 0], sizes = [8, 32], strides = [1, 1]} : vector<64x32xf32> to vector<8x32xf32>
    %39 = arith.truncf %37 : vector<8x32xf32> to vector<8x32xbf16>
    %cst_14 = arith.constant dense<0.000000e+00> : vector<8x32xf32>
    %40 = tpu.matmul %39, %6, %cst_14 {dimension_numbers = #tpu.dot_dimension_numbers<[1], [0], [0], [1], [0, 0, 1, 1], [], []>} : vector<8x32xbf16>, vector<32x32xbf16>, vector<8x32xf32> -> vector<8x32xf32>
    %41 = arith.addf %38, %40 : vector<8x32xf32>
    %42 = math.tanh %41 : vector<8x32xf32>
    %43 = vector.extract_strided_slice %5 {offsets = [56, 0], sizes = [8, 32], strides = [1, 1]} : vector<64x32xf32> to vector<8x32xf32>
    %44 = arith.truncf %42 : vector<8x32xf32> to vector<8x32xbf16>
    %cst_15 = arith.constant dense<0.000000e+00> : vector<8x32xf32>
    %45 = tpu.matmul %44, %6, %cst_15 {dimension_numbers = #tpu.dot_dimension_numbers<[1], [0], [0], [1], [0, 0, 1, 1], [], []>} : vector<8x32xbf16>, vector<32x32xbf16>, vector<8x32xf32> -> vector<8x32xf32>
    %46 = arith.addf %43, %45 : vector<8x32xf32>
    %47 = math.tanh %46 : vector<8x32xf32>
    %48 = arith.truncf %47 : vector<8x32xf32> to vector<8x32xbf16>
    %c0_16 = arith.constant 0 : index
    %c0_17 = arith.constant 0 : index
    %49 = vector.load %arg4[%c0_16, %c0_17] : memref<32x32xbf16, #tpu.memory_space<vmem>>, vector<32x32xbf16>
    %cst_18 = arith.constant dense<0.000000e+00> : vector<8x32xf32>
    %50 = tpu.matmul %48, %49, %cst_18 {dimension_numbers = #tpu.dot_dimension_numbers<[1], [0], [0], [1], [0, 0, 1, 1], [], []>} : vector<8x32xbf16>, vector<32x32xbf16>, vector<8x32xf32> -> vector<8x32xf32>
    %c0_19 = arith.constant 0 : index
    %c0_20 = arith.constant 0 : index
    %51 = vector.load %arg5[%c0_19, %c0_20] : memref<1x32xf32, #tpu.memory_space<vmem>>, vector<1x32xf32>
    %52 = vector.broadcast %51 : vector<1x32xf32> to vector<8x32xf32>
    %53 = arith.addf %50, %52 : vector<8x32xf32>
    %54 = math.tanh %53 : vector<8x32xf32>
    %c0_21 = arith.constant 0 : index
    %c0_22 = arith.constant 0 : index
    %55 = vector.load %arg7[%c0_21, %c0_22] : memref<32x32xbf16, #tpu.memory_space<vmem>>, vector<32x32xbf16>
    %c0_23 = arith.constant 0 : index
    %c0_24 = arith.constant 0 : index
    %56 = vector.load %arg8[%c0_23, %c0_24] : memref<32x32xbf16, #tpu.memory_space<vmem>>, vector<32x32xbf16>
    %c0_25 = arith.constant 0 : index
    %c0_26 = arith.constant 0 : index
    %57 = vector.load %arg9[%c0_25, %c0_26] : memref<32x32xbf16, #tpu.memory_space<vmem>>, vector<32x32xbf16>
    %c0_27 = arith.constant 0 : index
    %c0_28 = arith.constant 0 : index
    %58 = vector.load %arg10[%c0_27, %c0_28] : memref<8x32xf32, #tpu.memory_space<vmem>>, vector<8x32xf32>
    %59 = tpu.iota {dimensions = array<i32: 1>} : vector<8x32xi32>
    %c0_29 = arith.constant 0 : index
    %c0_30 = arith.constant 0 : index
    %60 = vector.load %arg6[%c0_29, %c0_30] : memref<8x32xf32, #tpu.memory_space<vmem>>, vector<8x32xf32>
    %61 = arith.truncf %54 : vector<8x32xf32> to vector<8x32xbf16>
    %cst_31 = arith.constant dense<0.000000e+00> : vector<8x32xf32>
    %62 = tpu.matmul %61, %56, %cst_31 {dimension_numbers = #tpu.dot_dimension_numbers<[1], [0], [0], [1], [0, 0, 1, 1], [], []>} : vector<8x32xbf16>, vector<32x32xbf16>, vector<8x32xf32> -> vector<8x32xf32>
    %63 = arith.addf %60, %62 : vector<8x32xf32>
    %64 = math.tanh %63 : vector<8x32xf32>
    %65 = arith.truncf %64 : vector<8x32xf32> to vector<8x32xbf16>
    %cst_32 = arith.constant dense<0.000000e+00> : vector<8x32xf32>
    %66 = tpu.matmul %65, %57, %cst_32 {dimension_numbers = #tpu.dot_dimension_numbers<[1], [0], [0], [1], [0, 0, 1, 1], [], []>} : vector<8x32xbf16>, vector<32x32xbf16>, vector<8x32xf32> -> vector<8x32xf32>
    %67 = arith.addf %66, %58 : vector<8x32xf32>
    %c0_33 = arith.constant 0 : index
    %c0_34 = arith.constant 0 : index
    %c0_35 = arith.constant 0 : index
    %68 = vector.load %arg11[%c0_33, %c0_34, %c0_35] : memref<8x8x32xf32, #tpu.memory_space<vmem>>, vector<1x8x32xf32>
    %69 = vector.shape_cast %68 : vector<1x8x32xf32> to vector<8x32xf32>
    %70 = vector.shape_cast %67 : vector<8x32xf32> to vector<1x8x32xf32>
    tpu.vector_store %arg11[%c0_33, %c0_34, %c0_35], %70 {strides = array<i32>} : memref<8x8x32xf32, #tpu.memory_space<vmem>>, vector<1x8x32xf32>,
    %cst_36 = arith.constant dense<0xFF800000> : vector<8xf32>
    %71 = vector.multi_reduction <maximumf>, %67, %cst_36 [1] : vector<8x32xf32> to vector<8xf32>
    %72 = vector.shape_cast %71 : vector<8xf32> to vector<8x1xf32>
    %73 = vector.broadcast %72 : vector<8x1xf32> to vector<8x32xf32>
    %74 = arith.cmpf oeq, %67, %73 : vector<8x32xf32>
    %c32_i32 = arith.constant 32 : i32
    %75 = vector.broadcast %c32_i32 : i32 to vector<8x32xi32>
    %76 = arith.select %74, %59, %75 : vector<8x32xi1>, vector<8x32xi32>
    %cst_37 = arith.constant dense<2147483647> : vector<8xi32>
    %77 = vector.multi_reduction <minsi>, %76, %cst_37 [1] : vector<8x32xi32> to vector<8xi32>
    %78 = vector.shape_cast %77 : vector<8xi32> to vector<8x1xi32>
    %79 = vector.broadcast %78 : vector<8x1xi32> to vector<8x32xi32>
    %80 = arith.cmpi eq, %59, %79 : vector<8x32xi32>
    %81 = arith.extui %80 : vector<8x32xi1> to vector<8x32xi32>
    %82 = arith.sitofp %81 : vector<8x32xi32> to vector<8x32xf32>
    %83 = arith.truncf %82 : vector<8x32xf32> to vector<8x32xbf16>
    %cst_38 = arith.constant dense<0.000000e+00> : vector<8x32xf32>
    %84 = tpu.matmul %83, %55, %cst_38 {dimension_numbers = #tpu.dot_dimension_numbers<[1], [0], [0], [1], [0, 0, 1, 1], [], []>} : vector<8x32xbf16>, vector<32x32xbf16>, vector<8x32xf32> -> vector<8x32xf32>
    %85 = arith.truncf %64 : vector<8x32xf32> to vector<8x32xbf16>
    %cst_39 = arith.constant dense<0.000000e+00> : vector<8x32xf32>
    %86 = tpu.matmul %85, %56, %cst_39 {dimension_numbers = #tpu.dot_dimension_numbers<[1], [0], [0], [1], [0, 0, 1, 1], [], []>} : vector<8x32xbf16>, vector<32x32xbf16>, vector<8x32xf32> -> vector<8x32xf32>
    %87 = arith.addf %84, %86 : vector<8x32xf32>
    %88 = math.tanh %87 : vector<8x32xf32>
    %89 = arith.truncf %88 : vector<8x32xf32> to vector<8x32xbf16>
    %cst_40 = arith.constant dense<0.000000e+00> : vector<8x32xf32>
    %90 = tpu.matmul %89, %57, %cst_40 {dimension_numbers = #tpu.dot_dimension_numbers<[1], [0], [0], [1], [0, 0, 1, 1], [], []>} : vector<8x32xbf16>, vector<32x32xbf16>, vector<8x32xf32> -> vector<8x32xf32>
    %91 = arith.addf %90, %58 : vector<8x32xf32>
    %c1 = arith.constant 1 : index
    %c0_41 = arith.constant 0 : index
    %c0_42 = arith.constant 0 : index
    %92 = vector.load %arg11[%c1, %c0_41, %c0_42] : memref<8x8x32xf32, #tpu.memory_space<vmem>>, vector<1x8x32xf32>
    %93 = vector.shape_cast %92 : vector<1x8x32xf32> to vector<8x32xf32>
    %94 = vector.shape_cast %91 : vector<8x32xf32> to vector<1x8x32xf32>
    tpu.vector_store %arg11[%c1, %c0_41, %c0_42], %94 {strides = array<i32>} : memref<8x8x32xf32, #tpu.memory_space<vmem>>, vector<1x8x32xf32>,
    %cst_43 = arith.constant dense<0xFF800000> : vector<8xf32>
    %95 = vector.multi_reduction <maximumf>, %91, %cst_43 [1] : vector<8x32xf32> to vector<8xf32>
    %96 = vector.shape_cast %95 : vector<8xf32> to vector<8x1xf32>
    %97 = vector.broadcast %96 : vector<8x1xf32> to vector<8x32xf32>
    %98 = arith.cmpf oeq, %91, %97 : vector<8x32xf32>
    %c32_i32_44 = arith.constant 32 : i32
    %99 = vector.broadcast %c32_i32_44 : i32 to vector<8x32xi32>
    %100 = arith.select %98, %59, %99 : vector<8x32xi1>, vector<8x32xi32>
    %cst_45 = arith.constant dense<2147483647> : vector<8xi32>
    %101 = vector.multi_reduction <minsi>, %100, %cst_45 [1] : vector<8x32xi32> to vector<8xi32>
    %102 = vector.shape_cast %101 : vector<8xi32> to vector<8x1xi32>
    %103 = vector.broadcast %102 : vector<8x1xi32> to vector<8x32xi32>
    %104 = arith.cmpi eq, %59, %103 : vector<8x32xi32>
    %105 = arith.extui %104 : vector<8x32xi1> to vector<8x32xi32>
    %106 = arith.sitofp %105 : vector<8x32xi32> to vector<8x32xf32>
    %107 = arith.truncf %106 : vector<8x32xf32> to vector<8x32xbf16>
    %cst_46 = arith.constant dense<0.000000e+00> : vector<8x32xf32>
    %108 = tpu.matmul %107, %55, %cst_46 {dimension_numbers = #tpu.dot_dimension_numbers<[1], [0], [0], [1], [0, 0, 1, 1], [], []>} : vector<8x32xbf16>, vector<32x32xbf16>, vector<8x32xf32> -> vector<8x32xf32>
    %109 = arith.truncf %88 : vector<8x32xf32> to vector<8x32xbf16>
    %cst_47 = arith.constant dense<0.000000e+00> : vector<8x32xf32>
    %110 = tpu.matmul %109, %56, %cst_47 {dimension_numbers = #tpu.dot_dimension_numbers<[1], [0], [0], [1], [0, 0, 1, 1], [], []>} : vector<8x32xbf16>, vector<32x32xbf16>, vector<8x32xf32> -> vector<8x32xf32>
    %111 = arith.addf %108, %110 : vector<8x32xf32>
    %112 = math.tanh %111 : vector<8x32xf32>
    %113 = arith.truncf %112 : vector<8x32xf32> to vector<8x32xbf16>
    %cst_48 = arith.constant dense<0.000000e+00> : vector<8x32xf32>
    %114 = tpu.matmul %113, %57, %cst_48 {dimension_numbers = #tpu.dot_dimension_numbers<[1], [0], [0], [1], [0, 0, 1, 1], [], []>} : vector<8x32xbf16>, vector<32x32xbf16>, vector<8x32xf32> -> vector<8x32xf32>
    %115 = arith.addf %114, %58 : vector<8x32xf32>
    %c2 = arith.constant 2 : index
    %c0_49 = arith.constant 0 : index
    %c0_50 = arith.constant 0 : index
    %116 = vector.load %arg11[%c2, %c0_49, %c0_50] : memref<8x8x32xf32, #tpu.memory_space<vmem>>, vector<1x8x32xf32>
    %117 = vector.shape_cast %116 : vector<1x8x32xf32> to vector<8x32xf32>
    %118 = vector.shape_cast %115 : vector<8x32xf32> to vector<1x8x32xf32>
    tpu.vector_store %arg11[%c2, %c0_49, %c0_50], %118 {strides = array<i32>} : memref<8x8x32xf32, #tpu.memory_space<vmem>>, vector<1x8x32xf32>,
    %cst_51 = arith.constant dense<0xFF800000> : vector<8xf32>
    %119 = vector.multi_reduction <maximumf>, %115, %cst_51 [1] : vector<8x32xf32> to vector<8xf32>
    %120 = vector.shape_cast %119 : vector<8xf32> to vector<8x1xf32>
    %121 = vector.broadcast %120 : vector<8x1xf32> to vector<8x32xf32>
    %122 = arith.cmpf oeq, %115, %121 : vector<8x32xf32>
    %c32_i32_52 = arith.constant 32 : i32
    %123 = vector.broadcast %c32_i32_52 : i32 to vector<8x32xi32>
    %124 = arith.select %122, %59, %123 : vector<8x32xi1>, vector<8x32xi32>
    %cst_53 = arith.constant dense<2147483647> : vector<8xi32>
    %125 = vector.multi_reduction <minsi>, %124, %cst_53 [1] : vector<8x32xi32> to vector<8xi32>
    %126 = vector.shape_cast %125 : vector<8xi32> to vector<8x1xi32>
    %127 = vector.broadcast %126 : vector<8x1xi32> to vector<8x32xi32>
    %128 = arith.cmpi eq, %59, %127 : vector<8x32xi32>
    %129 = arith.extui %128 : vector<8x32xi1> to vector<8x32xi32>
    %130 = arith.sitofp %129 : vector<8x32xi32> to vector<8x32xf32>
    %131 = arith.truncf %130 : vector<8x32xf32> to vector<8x32xbf16>
    %cst_54 = arith.constant dense<0.000000e+00> : vector<8x32xf32>
    %132 = tpu.matmul %131, %55, %cst_54 {dimension_numbers = #tpu.dot_dimension_numbers<[1], [0], [0], [1], [0, 0, 1, 1], [], []>} : vector<8x32xbf16>, vector<32x32xbf16>, vector<8x32xf32> -> vector<8x32xf32>
    %133 = arith.truncf %112 : vector<8x32xf32> to vector<8x32xbf16>
    %cst_55 = arith.constant dense<0.000000e+00> : vector<8x32xf32>
    %134 = tpu.matmul %133, %56, %cst_55 {dimension_numbers = #tpu.dot_dimension_numbers<[1], [0], [0], [1], [0, 0, 1, 1], [], []>} : vector<8x32xbf16>, vector<32x32xbf16>, vector<8x32xf32> -> vector<8x32xf32>
    %135 = arith.addf %132, %134 : vector<8x32xf32>
    %136 = math.tanh %135 : vector<8x32xf32>
    %137 = arith.truncf %136 : vector<8x32xf32> to vector<8x32xbf16>
    %cst_56 = arith.constant dense<0.000000e+00> : vector<8x32xf32>
    %138 = tpu.matmul %137, %57, %cst_56 {dimension_numbers = #tpu.dot_dimension_numbers<[1], [0], [0], [1], [0, 0, 1, 1], [], []>} : vector<8x32xbf16>, vector<32x32xbf16>, vector<8x32xf32> -> vector<8x32xf32>
    %139 = arith.addf %138, %58 : vector<8x32xf32>
    %c3 = arith.constant 3 : index
    %c0_57 = arith.constant 0 : index
    %c0_58 = arith.constant 0 : index
    %140 = vector.load %arg11[%c3, %c0_57, %c0_58] : memref<8x8x32xf32, #tpu.memory_space<vmem>>, vector<1x8x32xf32>
    %141 = vector.shape_cast %140 : vector<1x8x32xf32> to vector<8x32xf32>
    %142 = vector.shape_cast %139 : vector<8x32xf32> to vector<1x8x32xf32>
    tpu.vector_store %arg11[%c3, %c0_57, %c0_58], %142 {strides = array<i32>} : memref<8x8x32xf32, #tpu.memory_space<vmem>>, vector<1x8x32xf32>,
    %cst_59 = arith.constant dense<0xFF800000> : vector<8xf32>
    %143 = vector.multi_reduction <maximumf>, %139, %cst_59 [1] : vector<8x32xf32> to vector<8xf32>
    %144 = vector.shape_cast %143 : vector<8xf32> to vector<8x1xf32>
    %145 = vector.broadcast %144 : vector<8x1xf32> to vector<8x32xf32>
    %146 = arith.cmpf oeq, %139, %145 : vector<8x32xf32>
    %c32_i32_60 = arith.constant 32 : i32
    %147 = vector.broadcast %c32_i32_60 : i32 to vector<8x32xi32>
    %148 = arith.select %146, %59, %147 : vector<8x32xi1>, vector<8x32xi32>
    %cst_61 = arith.constant dense<2147483647> : vector<8xi32>
    %149 = vector.multi_reduction <minsi>, %148, %cst_61 [1] : vector<8x32xi32> to vector<8xi32>
    %150 = vector.shape_cast %149 : vector<8xi32> to vector<8x1xi32>
    %151 = vector.broadcast %150 : vector<8x1xi32> to vector<8x32xi32>
    %152 = arith.cmpi eq, %59, %151 : vector<8x32xi32>
    %153 = arith.extui %152 : vector<8x32xi1> to vector<8x32xi32>
    %154 = arith.sitofp %153 : vector<8x32xi32> to vector<8x32xf32>
    %155 = arith.truncf %154 : vector<8x32xf32> to vector<8x32xbf16>
    %cst_62 = arith.constant dense<0.000000e+00> : vector<8x32xf32>
    %156 = tpu.matmul %155, %55, %cst_62 {dimension_numbers = #tpu.dot_dimension_numbers<[1], [0], [0], [1], [0, 0, 1, 1], [], []>} : vector<8x32xbf16>, vector<32x32xbf16>, vector<8x32xf32> -> vector<8x32xf32>
    %157 = arith.truncf %136 : vector<8x32xf32> to vector<8x32xbf16>
    %cst_63 = arith.constant dense<0.000000e+00> : vector<8x32xf32>
    %158 = tpu.matmul %157, %56, %cst_63 {dimension_numbers = #tpu.dot_dimension_numbers<[1], [0], [0], [1], [0, 0, 1, 1], [], []>} : vector<8x32xbf16>, vector<32x32xbf16>, vector<8x32xf32> -> vector<8x32xf32>
    %159 = arith.addf %156, %158 : vector<8x32xf32>
    %160 = math.tanh %159 : vector<8x32xf32>
    %161 = arith.truncf %160 : vector<8x32xf32> to vector<8x32xbf16>
    %cst_64 = arith.constant dense<0.000000e+00> : vector<8x32xf32>
    %162 = tpu.matmul %161, %57, %cst_64 {dimension_numbers = #tpu.dot_dimension_numbers<[1], [0], [0], [1], [0, 0, 1, 1], [], []>} : vector<8x32xbf16>, vector<32x32xbf16>, vector<8x32xf32> -> vector<8x32xf32>
    %163 = arith.addf %162, %58 : vector<8x32xf32>
    %c4 = arith.constant 4 : index
    %c0_65 = arith.constant 0 : index
    %c0_66 = arith.constant 0 : index
    %164 = vector.load %arg11[%c4, %c0_65, %c0_66] : memref<8x8x32xf32, #tpu.memory_space<vmem>>, vector<1x8x32xf32>
    %165 = vector.shape_cast %164 : vector<1x8x32xf32> to vector<8x32xf32>
    %166 = vector.shape_cast %163 : vector<8x32xf32> to vector<1x8x32xf32>
    tpu.vector_store %arg11[%c4, %c0_65, %c0_66], %166 {strides = array<i32>} : memref<8x8x32xf32, #tpu.memory_space<vmem>>, vector<1x8x32xf32>,
    %cst_67 = arith.constant dense<0xFF800000> : vector<8xf32>
    %167 = vector.multi_reduction <maximumf>, %163, %cst_67 [1] : vector<8x32xf32> to vector<8xf32>
    %168 = vector.shape_cast %167 : vector<8xf32> to vector<8x1xf32>
    %169 = vector.broadcast %168 : vector<8x1xf32> to vector<8x32xf32>
    %170 = arith.cmpf oeq, %163, %169 : vector<8x32xf32>
    %c32_i32_68 = arith.constant 32 : i32
    %171 = vector.broadcast %c32_i32_68 : i32 to vector<8x32xi32>
    %172 = arith.select %170, %59, %171 : vector<8x32xi1>, vector<8x32xi32>
    %cst_69 = arith.constant dense<2147483647> : vector<8xi32>
    %173 = vector.multi_reduction <minsi>, %172, %cst_69 [1] : vector<8x32xi32> to vector<8xi32>
    %174 = vector.shape_cast %173 : vector<8xi32> to vector<8x1xi32>
    %175 = vector.broadcast %174 : vector<8x1xi32> to vector<8x32xi32>
    %176 = arith.cmpi eq, %59, %175 : vector<8x32xi32>
    %177 = arith.extui %176 : vector<8x32xi1> to vector<8x32xi32>
    %178 = arith.sitofp %177 : vector<8x32xi32> to vector<8x32xf32>
    %179 = arith.truncf %178 : vector<8x32xf32> to vector<8x32xbf16>
    %cst_70 = arith.constant dense<0.000000e+00> : vector<8x32xf32>
    %180 = tpu.matmul %179, %55, %cst_70 {dimension_numbers = #tpu.dot_dimension_numbers<[1], [0], [0], [1], [0, 0, 1, 1], [], []>} : vector<8x32xbf16>, vector<32x32xbf16>, vector<8x32xf32> -> vector<8x32xf32>
    %181 = arith.truncf %160 : vector<8x32xf32> to vector<8x32xbf16>
    %cst_71 = arith.constant dense<0.000000e+00> : vector<8x32xf32>
    %182 = tpu.matmul %181, %56, %cst_71 {dimension_numbers = #tpu.dot_dimension_numbers<[1], [0], [0], [1], [0, 0, 1, 1], [], []>} : vector<8x32xbf16>, vector<32x32xbf16>, vector<8x32xf32> -> vector<8x32xf32>
    %183 = arith.addf %180, %182 : vector<8x32xf32>
    %184 = math.tanh %183 : vector<8x32xf32>
    %185 = arith.truncf %184 : vector<8x32xf32> to vector<8x32xbf16>
    %cst_72 = arith.constant dense<0.000000e+00> : vector<8x32xf32>
    %186 = tpu.matmul %185, %57, %cst_72 {dimension_numbers = #tpu.dot_dimension_numbers<[1], [0], [0], [1], [0, 0, 1, 1], [], []>} : vector<8x32xbf16>, vector<32x32xbf16>, vector<8x32xf32> -> vector<8x32xf32>
    %187 = arith.addf %186, %58 : vector<8x32xf32>
    %c5 = arith.constant 5 : index
    %c0_73 = arith.constant 0 : index
    %c0_74 = arith.constant 0 : index
    %188 = vector.load %arg11[%c5, %c0_73, %c0_74] : memref<8x8x32xf32, #tpu.memory_space<vmem>>, vector<1x8x32xf32>
    %189 = vector.shape_cast %188 : vector<1x8x32xf32> to vector<8x32xf32>
    %190 = vector.shape_cast %187 : vector<8x32xf32> to vector<1x8x32xf32>
    tpu.vector_store %arg11[%c5, %c0_73, %c0_74], %190 {strides = array<i32>} : memref<8x8x32xf32, #tpu.memory_space<vmem>>, vector<1x8x32xf32>,
    %cst_75 = arith.constant dense<0xFF800000> : vector<8xf32>
    %191 = vector.multi_reduction <maximumf>, %187, %cst_75 [1] : vector<8x32xf32> to vector<8xf32>
    %192 = vector.shape_cast %191 : vector<8xf32> to vector<8x1xf32>
    %193 = vector.broadcast %192 : vector<8x1xf32> to vector<8x32xf32>
    %194 = arith.cmpf oeq, %187, %193 : vector<8x32xf32>
    %c32_i32_76 = arith.constant 32 : i32
    %195 = vector.broadcast %c32_i32_76 : i32 to vector<8x32xi32>
    %196 = arith.select %194, %59, %195 : vector<8x32xi1>, vector<8x32xi32>
    %cst_77 = arith.constant dense<2147483647> : vector<8xi32>
    %197 = vector.multi_reduction <minsi>, %196, %cst_77 [1] : vector<8x32xi32> to vector<8xi32>
    %198 = vector.shape_cast %197 : vector<8xi32> to vector<8x1xi32>
    %199 = vector.broadcast %198 : vector<8x1xi32> to vector<8x32xi32>
    %200 = arith.cmpi eq, %59, %199 : vector<8x32xi32>
    %201 = arith.extui %200 : vector<8x32xi1> to vector<8x32xi32>
    %202 = arith.sitofp %201 : vector<8x32xi32> to vector<8x32xf32>
    %203 = arith.truncf %202 : vector<8x32xf32> to vector<8x32xbf16>
    %cst_78 = arith.constant dense<0.000000e+00> : vector<8x32xf32>
    %204 = tpu.matmul %203, %55, %cst_78 {dimension_numbers = #tpu.dot_dimension_numbers<[1], [0], [0], [1], [0, 0, 1, 1], [], []>} : vector<8x32xbf16>, vector<32x32xbf16>, vector<8x32xf32> -> vector<8x32xf32>
    %205 = arith.truncf %184 : vector<8x32xf32> to vector<8x32xbf16>
    %cst_79 = arith.constant dense<0.000000e+00> : vector<8x32xf32>
    %206 = tpu.matmul %205, %56, %cst_79 {dimension_numbers = #tpu.dot_dimension_numbers<[1], [0], [0], [1], [0, 0, 1, 1], [], []>} : vector<8x32xbf16>, vector<32x32xbf16>, vector<8x32xf32> -> vector<8x32xf32>
    %207 = arith.addf %204, %206 : vector<8x32xf32>
    %208 = math.tanh %207 : vector<8x32xf32>
    %209 = arith.truncf %208 : vector<8x32xf32> to vector<8x32xbf16>
    %cst_80 = arith.constant dense<0.000000e+00> : vector<8x32xf32>
    %210 = tpu.matmul %209, %57, %cst_80 {dimension_numbers = #tpu.dot_dimension_numbers<[1], [0], [0], [1], [0, 0, 1, 1], [], []>} : vector<8x32xbf16>, vector<32x32xbf16>, vector<8x32xf32> -> vector<8x32xf32>
    %211 = arith.addf %210, %58 : vector<8x32xf32>
    %c6 = arith.constant 6 : index
    %c0_81 = arith.constant 0 : index
    %c0_82 = arith.constant 0 : index
    %212 = vector.load %arg11[%c6, %c0_81, %c0_82] : memref<8x8x32xf32, #tpu.memory_space<vmem>>, vector<1x8x32xf32>
    %213 = vector.shape_cast %212 : vector<1x8x32xf32> to vector<8x32xf32>
    %214 = vector.shape_cast %211 : vector<8x32xf32> to vector<1x8x32xf32>
    tpu.vector_store %arg11[%c6, %c0_81, %c0_82], %214 {strides = array<i32>} : memref<8x8x32xf32, #tpu.memory_space<vmem>>, vector<1x8x32xf32>,
    %cst_83 = arith.constant dense<0xFF800000> : vector<8xf32>
    %215 = vector.multi_reduction <maximumf>, %211, %cst_83 [1] : vector<8x32xf32> to vector<8xf32>
    %216 = vector.shape_cast %215 : vector<8xf32> to vector<8x1xf32>
    %217 = vector.broadcast %216 : vector<8x1xf32> to vector<8x32xf32>
    %218 = arith.cmpf oeq, %211, %217 : vector<8x32xf32>
    %c32_i32_84 = arith.constant 32 : i32
    %219 = vector.broadcast %c32_i32_84 : i32 to vector<8x32xi32>
    %220 = arith.select %218, %59, %219 : vector<8x32xi1>, vector<8x32xi32>
    %cst_85 = arith.constant dense<2147483647> : vector<8xi32>
    %221 = vector.multi_reduction <minsi>, %220, %cst_85 [1] : vector<8x32xi32> to vector<8xi32>
    %222 = vector.shape_cast %221 : vector<8xi32> to vector<8x1xi32>
    %223 = vector.broadcast %222 : vector<8x1xi32> to vector<8x32xi32>
    %224 = arith.cmpi eq, %59, %223 : vector<8x32xi32>
    %225 = arith.extui %224 : vector<8x32xi1> to vector<8x32xi32>
    %226 = arith.sitofp %225 : vector<8x32xi32> to vector<8x32xf32>
    %227 = arith.truncf %226 : vector<8x32xf32> to vector<8x32xbf16>
    %cst_86 = arith.constant dense<0.000000e+00> : vector<8x32xf32>
    %228 = tpu.matmul %227, %55, %cst_86 {dimension_numbers = #tpu.dot_dimension_numbers<[1], [0], [0], [1], [0, 0, 1, 1], [], []>} : vector<8x32xbf16>, vector<32x32xbf16>, vector<8x32xf32> -> vector<8x32xf32>
    %229 = arith.truncf %208 : vector<8x32xf32> to vector<8x32xbf16>
    %cst_87 = arith.constant dense<0.000000e+00> : vector<8x32xf32>
    %230 = tpu.matmul %229, %56, %cst_87 {dimension_numbers = #tpu.dot_dimension_numbers<[1], [0], [0], [1], [0, 0, 1, 1], [], []>} : vector<8x32xbf16>, vector<32x32xbf16>, vector<8x32xf32> -> vector<8x32xf32>
    %231 = arith.addf %228, %230 : vector<8x32xf32>
    %232 = math.tanh %231 : vector<8x32xf32>
    %233 = arith.truncf %232 : vector<8x32xf32> to vector<8x32xbf16>
    %cst_88 = arith.constant dense<0.000000e+00> : vector<8x32xf32>
    %234 = tpu.matmul %233, %57, %cst_88 {dimension_numbers = #tpu.dot_dimension_numbers<[1], [0], [0], [1], [0, 0, 1, 1], [], []>} : vector<8x32xbf16>, vector<32x32xbf16>, vector<8x32xf32> -> vector<8x32xf32>
    %235 = arith.addf %234, %58 : vector<8x32xf32>
    %c7 = arith.constant 7 : index
    %c0_89 = arith.constant 0 : index
    %c0_90 = arith.constant 0 : index
    %236 = vector.load %arg11[%c7, %c0_89, %c0_90] : memref<8x8x32xf32, #tpu.memory_space<vmem>>, vector<1x8x32xf32>
    %237 = vector.shape_cast %236 : vector<1x8x32xf32> to vector<8x32xf32>
    %238 = vector.shape_cast %235 : vector<8x32xf32> to vector<1x8x32xf32>
    tpu.vector_store %arg11[%c7, %c0_89, %c0_90], %238 {strides = array<i32>} : memref<8x8x32xf32, #tpu.memory_space<vmem>>, vector<1x8x32xf32>,
    return
  }
}

</mosaic_0001>

<llo_original>
// kernel: tpu_custom_call.1
$region0: #{tpu_custom_call.1}
  #allocation0 [shape = 'u32[]', space=smem, size = 0x4, offset = 0x4, fixed_abs, tag = 'smem constant byte address 0x4 - core index']
  #allocation1 [shape = 'u32[72,128]{1,0:T(1,128)}', space=vmem, size = 0x9000, scoped, tag = 'internal scratch']
  %s0 = inlined_call_operand.vmem [shape: bf16[64,16], index: 0, kind: input, shape index: {}]
  %s1 = inlined_call_operand.hbm [shape: bf16[16,32], index: 1, kind: input, shape index: {}]
  %s2 = inlined_call_operand.hbm [shape: f32[1,32], index: 2, kind: input, shape index: {}]
  %s3 = inlined_call_operand.vmem [shape: bf16[32,32], index: 3, kind: input, shape index: {}]
  %s4 = inlined_call_operand.vmem [shape: bf16[32,32], index: 4, kind: input, shape index: {}]
  %s5 = inlined_call_operand.hbm [shape: f32[1,32], index: 5, kind: input, shape index: {}]
  %s6 = inlined_call_operand.hbm [shape: f32[8,32], index: 6, kind: input, shape index: {}]
  %s7 = inlined_call_operand.hbm [shape: bf16[32,32], index: 7, kind: input, shape index: {}]
  %s8 = inlined_call_operand.hbm [shape: bf16[32,32], index: 8, kind: input, shape index: {}]
  %s9 = inlined_call_operand.vmem [shape: bf16[32,32], index: 9, kind: input, shape index: {}]
  %s10 = inlined_call_operand.hbm [shape: f32[8,32], index: 10, kind: input, shape index: {}]
  %s11 = inlined_call_operand.hbm [shape: f32[8,8,32], index: 11, kind: output, shape index: {}]
  %s12 = sld [smem:[#allocation0]]
  $region82: #{tpu_custom_call.1} parent=0
    _
  %s14 = ssub.s32 1, %s12
  %s15 = scalar_select 0, %s14, %s12
  $region1: #{tpu_custom_call.1} parent=0
    #allocation2 [shape = 'u8[4096]{0}', space=vmem, size = 0x1000, scoped, tag = 'input window, operand 1, single buffered']
    #allocation3 [shape = 's32[1]{0}', space=sflag, size = 0x4, scoped, tag = 'scoped memory for tpu_custom_call.1']
    #allocation4 [shape = 's32[1]{0}', space=sflag, size = 0x4, scoped, tag = 'scoped memory for tpu_custom_call.1']
    #allocation5 [shape = 'u8[512]{0}', space=vmem, size = 0x400, scoped, tag = 'input window, operand 2, single buffered']
    #allocation6 [shape = 's32[1]{0}', space=sflag, size = 0x4, scoped, tag = 'scoped memory for tpu_custom_call.1']
    #allocation7 [shape = 'u8[512]{0}', space=vmem, size = 0x400, scoped, tag = 'input window, operand 5, single buffered']
    #allocation8 [shape = 'u8[4096]{0}', space=vmem, size = 0x1000, scoped, tag = 'input window, operand 6, single buffered']
    #allocation9 [shape = 's32[1]{0}', space=sflag, size = 0x4, scoped, tag = 'scoped memory for tpu_custom_call.1']
    #allocation10 [shape = 'u8[8192]{0}', space=vmem, size = 0x2000, scoped, tag = 'input window, operand 7, single buffered']
    #allocation11 [shape = 'u8[8192]{0}', space=vmem, size = 0x2000, scoped, tag = 'input window, operand 8, single buffered']
    #allocation12 [shape = 's32[1]{0}', space=sflag, size = 0x4, scoped, tag = 'scoped memory for tpu_custom_call.1']
    #allocation13 [shape = 'u8[4096]{0}', space=vmem, size = 0x1000, scoped, tag = 'input window, operand 10, single buffered']
    #allocation14 [shape = 'u8[32768]{0}', space=vmem, size = 0x8000, scoped, tag = 'output window, operand 0, single buffered']
    %16 = vsyncpa [#allocation3], 0
    %17 = vsyncpa [#allocation6], 0
    %18 = vsyncpa [#allocation9], 0
    %19 = vsyncpa [#allocation12], 0
    %20 = vsyncpa [#allocation4], 0
    // Predicated region
    $region2: #{tpu_custom_call.1} parent=1 // pred_check
      _
    $region3: #{tpu_custom_call.1} parent=1 // pred_check_branch
      %22 = sbr.rel (0) target = $region5
    $region4: #{tpu_custom_call.1} parent=1 // pred_region
      _
    $region5: #{tpu_custom_call.1} parent=1 // pred_fallthru
      _
    // Predicated region
    $region6: #{tpu_custom_call.1} parent=1 // pred_check
      _
    $region7: #{tpu_custom_call.1} parent=1 // pred_check_branch
      %24 = sbr.rel (0) target = $region9
    $region8: #{tpu_custom_call.1} parent=1 // pred_region
      %26 = vsyncadd [#allocation3], 0
      %s27 = sshll.u32 %s1, 4
      %s28 = int_to_ptr.hbm [resolvable:$true] %s27
      %s29 = sshll.u32 [#allocation2], 4
      %s30 = int_to_ptr.vmem [resolvable:$true] %s29
      %35 = dma.hbm_to_vmem [thread:$0]  %s28, 128, %s30, [#allocation3], 64, 64, 4
    $region9: #{tpu_custom_call.1} parent=1 // pred_fallthru
      _
    // Predicated region
    $region10: #{tpu_custom_call.1} parent=1 // pred_check
      _
    $region11: #{tpu_custom_call.1} parent=1 // pred_check_branch
      %37 = sbr.rel (0) target = $region13
    $region12: #{tpu_custom_call.1} parent=1 // pred_region
      %39 = vsyncadd [#allocation6], 0
      %s41 = sshll.u32 %s2, 4
      %s42 = int_to_ptr.hbm [resolvable:$true] %s41
      %s43 = sshll.u32 [#allocation5], 4
      %s44 = int_to_ptr.vmem [resolvable:$true] %s43
      %46 = dma.hbm_to_vmem [thread:$0]  %s42, 16, %s44, [#allocation6]
    $region13: #{tpu_custom_call.1} parent=1 // pred_fallthru
      _
    // Predicated region
    $region14: #{tpu_custom_call.1} parent=1 // pred_check
      _
    $region15: #{tpu_custom_call.1} parent=1 // pred_check_branch
      %48 = sbr.rel (0) target = $region17
    $region16: #{tpu_custom_call.1} parent=1 // pred_region
      _
    $region17: #{tpu_custom_call.1} parent=1 // pred_fallthru
      _
    // Predicated region
    $region18: #{tpu_custom_call.1} parent=1 // pred_check
      _
    $region19: #{tpu_custom_call.1} parent=1 // pred_check_branch
      %50 = sbr.rel (0) target = $region21
    $region20: #{tpu_custom_call.1} parent=1 // pred_region
      _
    $region21: #{tpu_custom_call.1} parent=1 // pred_fallthru
      _
    // Predicated region
    $region22: #{tpu_custom_call.1} parent=1 // pred_check
      _
    $region23: #{tpu_custom_call.1} parent=1 // pred_check_branch
      %52 = sbr.rel (0) target = $region25
    $region24: #{tpu_custom_call.1} parent=1 // pred_region
      %54 = vsyncadd [#allocation6], 0
      %s56 = sshll.u32 %s5, 4
      %s57 = int_to_ptr.hbm [resolvable:$true] %s56
      %s58 = sshll.u32 [#allocation7], 4
      %s59 = int_to_ptr.vmem [resolvable:$true] %s58
      %61 = dma.hbm_to_vmem [thread:$0]  %s57, 16, %s59, [#allocation6]
    $region25: #{tpu_custom_call.1} parent=1 // pred_fallthru
      _
    // Predicated region
    $region26: #{tpu_custom_call.1} parent=1 // pred_check
      _
    $region27: #{tpu_custom_call.1} parent=1 // pred_check_branch
      %63 = sbr.rel (0) target = $region29
    $region28: #{tpu_custom_call.1} parent=1 // pred_region
      %65 = vsyncadd [#allocation9], 0
      %s67 = sshll.u32 %s6, 4
      %s68 = int_to_ptr.hbm [resolvable:$true] %s67
      %s69 = sshll.u32 [#allocation8], 4
      %s70 = int_to_ptr.vmem [resolvable:$true] %s69
      %72 = dma.hbm_to_vmem [thread:$0]  %s68, 128, %s70, [#allocation9]
    $region29: #{tpu_custom_call.1} parent=1 // pred_fallthru
      _
    // Predicated region
    $region30: #{tpu_custom_call.1} parent=1 // pred_check
      _
    $region31: #{tpu_custom_call.1} parent=1 // pred_check_branch
      %74 = sbr.rel (0) target = $region33
    $region32: #{tpu_custom_call.1} parent=1 // pred_region
      %76 = vsyncadd [#allocation9], 0
      %s77 = sshll.u32 %s7, 4
      %s78 = int_to_ptr.hbm [resolvable:$true] %s77
      %s79 = sshll.u32 [#allocation10], 4
      %s80 = int_to_ptr.vmem [resolvable:$true] %s79
      %85 = dma.hbm_to_vmem [thread:$0]  %s78, 256, %s80, [#allocation9], 64, 64, 4
    $region33: #{tpu_custom_call.1} parent=1 // pred_fallthru
      _
    // Predicated region
    $region34: #{tpu_custom_call.1} parent=1 // pred_check
      _
    $region35: #{tpu_custom_call.1} parent=1 // pred_check_branch
      %87 = sbr.rel (0) target = $region37
    $region36: #{tpu_custom_call.1} parent=1 // pred_region
      %89 = vsyncadd [#allocation12], 0
      %s90 = sshll.u32 %s8, 4
      %s91 = int_to_ptr.hbm [resolvable:$true] %s90
      %s92 = sshll.u32 [#allocation11], 4
      %s93 = int_to_ptr.vmem [resolvable:$true] %s92
      %98 = dma.hbm_to_vmem [thread:$0]  %s91, 256, %s93, [#allocation12], 64, 64, 4
    $region37: #{tpu_custom_call.1} parent=1 // pred_fallthru
      _
    // Predicated region
    $region38: #{tpu_custom_call.1} parent=1 // pred_check
      _
    $region39: #{tpu_custom_call.1} parent=1 // pred_check_branch
      %100 = sbr.rel (0) target = $region41
    $region40: #{tpu_custom_call.1} parent=1 // pred_region
      _
    $region41: #{tpu_custom_call.1} parent=1 // pred_fallthru
      _
    // Predicated region
    $region42: #{tpu_custom_call.1} parent=1 // pred_check
      _
    $region43: #{tpu_custom_call.1} parent=1 // pred_check_branch
      %102 = sbr.rel (0) target = $region45
    $region44: #{tpu_custom_call.1} parent=1 // pred_region
      %104 = vsyncadd [#allocation12], 0
      %s106 = sshll.u32 %s10, 4
      %s107 = int_to_ptr.hbm [resolvable:$true] %s106
      %s108 = sshll.u32 [#allocation13], 4
      %s109 = int_to_ptr.vmem [resolvable:$true] %s108
      %111 = dma.hbm_to_vmem [thread:$0]  %s107, 128, %s109, [#allocation12]
    $region45: #{tpu_custom_call.1} parent=1 // pred_fallthru
      _
    // Predicated region
    $region46: #{tpu_custom_call.1} parent=1 // pred_check
      _
    $region47: #{tpu_custom_call.1} parent=1 // pred_check_branch
      %113 = sbr.rel (0) target = $region49
    $region48: #{tpu_custom_call.1} parent=1 // pred_region
      %115 = dma.done [#allocation3], 128
    $region49: #{tpu_custom_call.1} parent=1 // pred_fallthru
      _
    // Predicated region
    $region50: #{tpu_custom_call.1} parent=1 // pred_check
      _
    $region51: #{tpu_custom_call.1} parent=1 // pred_check_branch
      %117 = sbr.rel (0) target = $region53
    $region52: #{tpu_custom_call.1} parent=1 // pred_region
      %119 = dma.done [#allocation6], 16
    $region53: #{tpu_custom_call.1} parent=1 // pred_fallthru
      _
    // Predicated region
    $region54: #{tpu_custom_call.1} parent=1 // pred_check
      _
    $region55: #{tpu_custom_call.1} parent=1 // pred_check_branch
      %121 = sbr.rel (0) target = $region57
    $region56: #{tpu_custom_call.1} parent=1 // pred_region
      %123 = dma.done [#allocation6], 16
    $region57: #{tpu_custom_call.1} parent=1 // pred_fallthru
      _
    // Predicated region
    $region58: #{tpu_custom_call.1} parent=1 // pred_check
      _
    $region59: #{tpu_custom_call.1} parent=1 // pred_check_branch
      %125 = sbr.rel (0) target = $region61
    $region60: #{tpu_custom_call.1} parent=1 // pred_region
      %127 = dma.done [#allocation9], 128
    $region61: #{tpu_custom_call.1} parent=1 // pred_fallthru
      _
    // Predicated region
    $region62: #{tpu_custom_call.1} parent=1 // pred_check
      _
    $region63: #{tpu_custom_call.1} parent=1 // pred_check_branch
      %129 = sbr.rel (0) target = $region65
    $region64: #{tpu_custom_call.1} parent=1 // pred_region
      %131 = dma.done [#allocation9], 256
    $region65: #{tpu_custom_call.1} parent=1 // pred_fallthru
      _
    // Predicated region
    $region66: #{tpu_custom_call.1} parent=1 // pred_check
      _
    $region67: #{tpu_custom_call.1} parent=1 // pred_check_branch
      %133 = sbr.rel (0) target = $region69
    $region68: #{tpu_custom_call.1} parent=1 // pred_region
      %135 = dma.done [#allocation12], 256
    $region69: #{tpu_custom_call.1} parent=1 // pred_fallthru
      _
    // Predicated region
    $region70: #{tpu_custom_call.1} parent=1 // pred_check
      _
    $region71: #{tpu_custom_call.1} parent=1 // pred_check_branch
      %137 = sbr.rel (0) target = $region73
    $region72: #{tpu_custom_call.1} parent=1 // pred_region
      %139 = dma.done [#allocation12], 128
    $region73: #{tpu_custom_call.1} parent=1 // pred_fallthru
      _
    %v141 = vld [vmem:[%s0] sm:$0xf]
    %v142 = vld [vmem:[%s0 + $0x4] sm:$0xf]
    %v143 = vld [vmem:[%s0 + $0x8] sm:$0xf]
    %v144 = vld [vmem:[%s0 + $0xc] sm:$0xf]
    %v145 = vld [vmem:[%s0 + $0x10] sm:$0xf]
    %v146 = vld [vmem:[%s0 + $0x14] sm:$0xf]
    %v147 = vld [vmem:[%s0 + $0x18] sm:$0xf]
    %v148 = vld [vmem:[%s0 + $0x1c] sm:$0xf]
    %v149 = vld [vmem:[#allocation2] sm:$0xf]
    %v150 = vld [vmem:[#allocation2 + $0x4] sm:$0xf]
    %v151 = vld [vmem:[#allocation5] sm:$0x1]
    %v153 = vperm.slane %v151, 0
    %v163 = vunpack.c.l.b16 %v141
    %v164 = vunpack.c.l.b16 %v142
    %v165 = vunpack.c.l.b16 %v143
    %v166 = vunpack.c.l.b16 %v144
    %v167 = vunpack.c.l.b16 %v145
    %v168 = vunpack.c.l.b16 %v146
    %v169 = vunpack.c.l.b16 %v147
    %v170 = vunpack.c.l.b16 %v148
    %v171 = vpack.c.b16 %v164, %v163
    %v172 = vpack.c.b16 %v166, %v165
    %v173 = vpack.c.b16 %v168, %v167
    %v174 = vpack.c.b16 %v170, %v169
    %v177 = vunpack.c.l.b16 %v149
    %v178 = vunpack.c.l.b16 %v150
    %v179 = vpack.c.b16 %v178, %v177
    %vm181 = vcmask 130048
    %v183 = vsel %vm181, %v171, 0
    %v186 = vsel %vm181, %v172, 0
    %v189 = vsel %vm181, %v173, 0
    %v192 = vsel %vm181, %v174, 0
    %194 = vmatpush.bf16.msra.mxu0 0
    %195 = vmatpush.bf16.msra.mxu0 0
    %196 = vmatpush.bf16.msra.mxu0 0
    %197 = vmatpush.bf16.msra.mxu0 0
    %198 = vmatpush.bf16.msra.mxu0 0
    %199 = vmatpush.bf16.msra.mxu0 0
    %200 = vmatpush.bf16.msra.mxu0 0
    %201 = vmatpush.bf16.msra.mxu0 %v179
    %202 = vmatmul.bf16.gmra.mxu0 %v183
    %v203 = vpop.f32.mrf.mxu0
    %v204 = vadd.f32 %v153, %v203
    %v205 = vpop.f32.mrf.mxu0
    %v206 = vadd.f32 %v153, %v205
    %207 = vmatmul.bf16.gmra.mxu0 %v186
    %v208 = vpop.f32.mrf.mxu0
    %v209 = vadd.f32 %v153, %v208
    %v210 = vpop.f32.mrf.mxu0
    %v211 = vadd.f32 %v153, %v210
    %212 = vmatmul.bf16.gmra.mxu0 %v189
    %v213 = vpop.f32.mrf.mxu0
    %v214 = vadd.f32 %v153, %v213
    %v215 = vpop.f32.mrf.mxu0
    %v216 = vadd.f32 %v153, %v215
    %217 = vmatmul.bf16.gmra.mxu0 %v192
    %v218 = vpop.f32.mrf.mxu0
    %v219 = vadd.f32 %v153, %v218
    %v220 = vpop.f32.mrf.mxu0
    %v221 = vadd.f32 %v153, %v220
    %222 = vdwg.mxu0
    %v223 = vld [vmem:[%s3] sm:$0xf]
    %v224 = vld [vmem:[%s3 + $0x4] sm:$0xf]
    %v225 = vld [vmem:[%s3 + $0x8] sm:$0xf]
    %v226 = vld [vmem:[%s3 + $0xc] sm:$0xf]
    %v231 = vunpack.c.l.b16 %v223
    %v232 = vunpack.c.l.b16 %v224
    %v233 = vunpack.c.l.b16 %v225
    %v234 = vunpack.c.l.b16 %v226
    %v235 = vpack.c.b16 %v232, %v231
    %v236 = vpack.c.b16 %v234, %v233
    %vm239 = vcmask 261120
    %v241 = vsel %vm239, 0, 0
    %243 = vmatpush.bf16.msra.mxu0 0
    %244 = vmatpush.bf16.msra.mxu0 0
    %245 = vmatpush.bf16.msra.mxu0 0
    %246 = vmatpush.bf16.msra.mxu0 0
    %247 = vmatpush.bf16.msra.mxu0 0
    %248 = vmatpush.bf16.msra.mxu0 0
    %249 = vmatpush.bf16.msra.mxu0 %v236
    %250 = vmatpush.bf16.msra.mxu0 %v235
    %251 = vmatmul.bf16.gmra.mxu0 %v241
    %v252 = vpop.f32.mrf.mxu0
    %v253 = vadd.f32 0.0, %v252
    %v254 = vpop.f32.mrf.mxu0
    %255 = vdwg.mxu0
    %v256 = vadd.f32 %v204, %v253
    %v257 = vtanh.pop %v256
    %v258 = vpack.c.bf16 %v257, %v257
    %v260 = vsel %vm239, %v258, 0
    %262 = vmatpush.bf16.msra.mxu0 0
    %263 = vmatpush.bf16.msra.mxu0 0
    %264 = vmatpush.bf16.msra.mxu0 0
    %265 = vmatpush.bf16.msra.mxu0 0
    %266 = vmatpush.bf16.msra.mxu0 0
    %267 = vmatpush.bf16.msra.mxu0 0
    %268 = vmatpush.bf16.msra.mxu0 %v236
    %269 = vmatpush.bf16.msra.mxu0 %v235
    %270 = vmatmul.bf16.gmra.mxu0 %v260
    %v271 = vpop.f32.mrf.mxu0
    %v272 = vadd.f32 0.0, %v271
    %v273 = vpop.f32.mrf.mxu0
    %274 = vdwg.mxu0
    %v275 = vadd.f32 %v206, %v272
    %v276 = vtanh.pop %v275
    %v277 = vpack.c.bf16 %v276, %v276
    %v279 = vsel %vm239, %v277, 0
    %281 = vmatpush.bf16.msra.mxu0 0
    %282 = vmatpush.bf16.msra.mxu0 0
    %283 = vmatpush.bf16.msra.mxu0 0
    %284 = vmatpush.bf16.msra.mxu0 0
    %285 = vmatpush.bf16.msra.mxu0 0
    %286 = vmatpush.bf16.msra.mxu0 0
    %287 = vmatpush.bf16.msra.mxu0 %v236
    %288 = vmatpush.bf16.msra.mxu0 %v235
    %289 = vmatmul.bf16.gmra.mxu0 %v279
    %v290 = vpop.f32.mrf.mxu0
    %v291 = vadd.f32 0.0, %v290
    %v292 = vpop.f32.mrf.mxu0
    %293 = vdwg.mxu0
    %v294 = vadd.f32 %v209, %v291
    %v295 = vtanh.pop %v294
    %v296 = vpack.c.bf16 %v295, %v295
    %v298 = vsel %vm239, %v296, 0
    %300 = vmatpush.bf16.msra.mxu0 0
    %301 = vmatpush.bf16.msra.mxu0 0
    %302 = vmatpush.bf16.msra.mxu0 0
    %303 = vmatpush.bf16.msra.mxu0 0
    %304 = vmatpush.bf16.msra.mxu0 0
    %305 = vmatpush.bf16.msra.mxu0 0
    %306 = vmatpush.bf16.msra.mxu0 %v236
    %307 = vmatpush.bf16.msra.mxu0 %v235
    %308 = vmatmul.bf16.gmra.mxu0 %v298
    %v309 = vpop.f32.mrf.mxu0
    %v310 = vadd.f32 0.0, %v309
    %v311 = vpop.f32.mrf.mxu0
    %312 = vdwg.mxu0
    %v313 = vadd.f32 %v211, %v310
    %v314 = vtanh.pop %v313
    %v315 = vpack.c.bf16 %v314, %v314
    %v317 = vsel %vm239, %v315, 0
    %319 = vmatpush.bf16.msra.mxu0 0
    %320 = vmatpush.bf16.msra.mxu0 0
    %321 = vmatpush.bf16.msra.mxu0 0
    %322 = vmatpush.bf16.msra.mxu0 0
    %323 = vmatpush.bf16.msra.mxu0 0
    %324 = vmatpush.bf16.msra.mxu0 0
    %325 = vmatpush.bf16.msra.mxu0 %v236
    %326 = vmatpush.bf16.msra.mxu0 %v235
    %327 = vmatmul.bf16.gmra.mxu0 %v317
    %v328 = vpop.f32.mrf.mxu0
    %v329 = vadd.f32 0.0, %v328
    %v330 = vpop.f32.mrf.mxu0
    %331 = vdwg.mxu0
    %v332 = vadd.f32 %v214, %v329
    %v333 = vtanh.pop %v332
    %v334 = vpack.c.bf16 %v333, %v333
    %v336 = vsel %vm239, %v334, 0
    %338 = vmatpush.bf16.msra.mxu0 0
    %339 = vmatpush.bf16.msra.mxu0 0
    %340 = vmatpush.bf16.msra.mxu0 0
    %341 = vmatpush.bf16.msra.mxu0 0
    %342 = vmatpush.bf16.msra.mxu0 0
    %343 = vmatpush.bf16.msra.mxu0 0
    %344 = vmatpush.bf16.msra.mxu0 %v236
    %345 = vmatpush.bf16.msra.mxu0 %v235
    %346 = vmatmul.bf16.gmra.mxu0 %v336
    %v347 = vpop.f32.mrf.mxu0
    %v348 = vadd.f32 0.0, %v347
    %v349 = vpop.f32.mrf.mxu0
    %350 = vdwg.mxu0
    %v351 = vadd.f32 %v216, %v348
    %v352 = vtanh.pop %v351
    %v353 = vpack.c.bf16 %v352, %v352
    %v355 = vsel %vm239, %v353, 0
    %357 = vmatpush.bf16.msra.mxu0 0
    %358 = vmatpush.bf16.msra.mxu0 0
    %359 = vmatpush.bf16.msra.mxu0 0
    %360 = vmatpush.bf16.msra.mxu0 0
    %361 = vmatpush.bf16.msra.mxu0 0
    %362 = vmatpush.bf16.msra.mxu0 0
    %363 = vmatpush.bf16.msra.mxu0 %v236
    %364 = vmatpush.bf16.msra.mxu0 %v235
    %365 = vmatmul.bf16.gmra.mxu0 %v355
    %v366 = vpop.f32.mrf.mxu0
    %v367 = vadd.f32 0.0, %v366
    %v368 = vpop.f32.mrf.mxu0
    %369 = vdwg.mxu0
    %v370 = vadd.f32 %v219, %v367
    %v371 = vtanh.pop %v370
    %v372 = vpack.c.bf16 %v371, %v371
    %v374 = vsel %vm239, %v372, 0
    %376 = vmatpush.bf16.msra.mxu0 0
    %377 = vmatpush.bf16.msra.mxu0 0
    %378 = vmatpush.bf16.msra.mxu0 0
    %379 = vmatpush.bf16.msra.mxu0 0
    %380 = vmatpush.bf16.msra.mxu0 0
    %381 = vmatpush.bf16.msra.mxu0 0
    %382 = vmatpush.bf16.msra.mxu0 %v236
    %383 = vmatpush.bf16.msra.mxu0 %v235
    %384 = vmatmul.bf16.gmra.mxu0 %v374
    %v385 = vpop.f32.mrf.mxu0
    %v386 = vadd.f32 0.0, %v385
    %v387 = vpop.f32.mrf.mxu0
    %388 = vdwg.mxu0
    %v389 = vadd.f32 %v221, %v386
    %v390 = vtanh.pop %v389
    %v391 = vpack.c.bf16 %v390, %v390
    %v392 = vld [vmem:[%s4] sm:$0xf]
    %v393 = vld [vmem:[%s4 + $0x4] sm:$0xf]
    %v394 = vld [vmem:[%s4 + $0x8] sm:$0xf]
    %v395 = vld [vmem:[%s4 + $0xc] sm:$0xf]
    %v396 = vld [vmem:[#allocation7] sm:$0x1]
    %v398 = vperm.slane %v396, 0
    %v404 = vunpack.c.l.b16 %v392
    %v405 = vunpack.c.l.b16 %v393
    %v406 = vunpack.c.l.b16 %v394
    %v407 = vunpack.c.l.b16 %v395
    %v408 = vpack.c.b16 %v405, %v404
    %v409 = vpack.c.b16 %v407, %v406
    %v413 = vsel %vm239, %v391, 0
    %415 = vmatpush.bf16.msra.mxu0 0
    %416 = vmatpush.bf16.msra.mxu0 0
    %417 = vmatpush.bf16.msra.mxu0 0
    %418 = vmatpush.bf16.msra.mxu0 0
    %419 = vmatpush.bf16.msra.mxu0 0
    %420 = vmatpush.bf16.msra.mxu0 0
    %421 = vmatpush.bf16.msra.mxu0 %v409
    %422 = vmatpush.bf16.msra.mxu0 %v408
    %423 = vmatmul.bf16.gmra.mxu0 %v413
    %v424 = vpop.f32.mrf.mxu0
    %v425 = vadd.f32 %v398, %v424
    %v426 = vpop.f32.mrf.mxu0
    %427 = vdwg.mxu0
    %v428 = vtanh.pop %v425
    %v429 = vld [vmem:[#allocation10] sm:$0xf]
    %v430 = vld [vmem:[#allocation10 + $0x4] sm:$0xf]
    %v431 = vld [vmem:[#allocation10 + $0x8] sm:$0xf]
    %v432 = vld [vmem:[#allocation10 + $0xc] sm:$0xf]
    %v433 = vld [vmem:[#allocation11] sm:$0xf]
    %v434 = vld [vmem:[#allocation11 + $0x4] sm:$0xf]
    %v435 = vld [vmem:[#allocation11 + $0x8] sm:$0xf]
    %v436 = vld [vmem:[#allocation11 + $0xc] sm:$0xf]
    %v437 = vld [vmem:[%s9] sm:$0xf]
    %v438 = vld [vmem:[%s9 + $0x4] sm:$0xf]
    %v439 = vld [vmem:[%s9 + $0x8] sm:$0xf]
    %v440 = vld [vmem:[%s9 + $0xc] sm:$0xf]
    %v441 = vld [vmem:[#allocation13] sm:$0xff]
    %v442 = vlaneseq
    %v443 = vand.u32 %v442, 127
    %v444 = vld [vmem:[#allocation8] sm:$0xff]
    %v445 = vpack.c.bf16 %v428, %v428
    %v450 = vunpack.c.l.b16 %v433
    %v451 = vunpack.c.l.b16 %v434
    %v452 = vunpack.c.l.b16 %v435
    %v453 = vunpack.c.l.b16 %v436
    %v454 = vpack.c.b16 %v451, %v450
    %v455 = vpack.c.b16 %v453, %v452
    %v459 = vsel %vm239, %v445, 0
    %461 = vmatpush.bf16.msra.mxu0 0
    %462 = vmatpush.bf16.msra.mxu0 0
    %463 = vmatpush.bf16.msra.mxu0 0
    %464 = vmatpush.bf16.msra.mxu0 0
    %465 = vmatpush.bf16.msra.mxu0 0
    %466 = vmatpush.bf16.msra.mxu0 0
    %467 = vmatpush.bf16.msra.mxu0 %v455
    %468 = vmatpush.bf16.msra.mxu0 %v454
    %469 = vmatmul.bf16.gmra.mxu0 %v459
    %v470 = vpop.f32.mrf.mxu0
    %v471 = vadd.f32 0.0, %v470
    %v472 = vpop.f32.mrf.mxu0
    %473 = vdwg.mxu0
    %v474 = vadd.f32 %v444, %v471
    %v475 = vtanh.pop %v474
    %v476 = vpack.c.bf16 %v475, %v475
    %v481 = vunpack.c.l.b16 %v437
    %v482 = vunpack.c.l.b16 %v438
    %v483 = vunpack.c.l.b16 %v439
    %v484 = vunpack.c.l.b16 %v440
    %v485 = vpack.c.b16 %v482, %v481
    %v486 = vpack.c.b16 %v484, %v483
    %v490 = vsel %vm239, %v476, 0
    %492 = vmatpush.bf16.msra.mxu0 0
    %493 = vmatpush.bf16.msra.mxu0 0
    %494 = vmatpush.bf16.msra.mxu0 0
    %495 = vmatpush.bf16.msra.mxu0 0
    %496 = vmatpush.bf16.msra.mxu0 0
    %497 = vmatpush.bf16.msra.mxu0 0
    %498 = vmatpush.bf16.msra.mxu0 %v486
    %499 = vmatpush.bf16.msra.mxu0 %v485
    %500 = vmatmul.bf16.gmra.mxu0 %v490
    %v501 = vpop.f32.mrf.mxu0
    %v502 = vadd.f32 %v441, %v501
    %v503 = vpop.f32.mrf.mxu0
    %504 = vdwg.mxu0
    %505 = vst.msk [vmem:[#allocation14] sm:$0xff] %vm239, %v502
    %v506 = vsel %vm239, %v502, -inf
    %507 = vmax.xlane.f32.xlu0 %v506
    %v508 = vpop.xlane.xlu0 %507
    %vm509 = vcmp.eq.f32.partialorder %v502, %v508
    %v510 = vsel %vm509, %v443, 32
    %v511 = vsel %vm239, %v510, 2147483647
    %v512 = vand.u32 %v511, 65535
    %v513 = vshra.s32 %v511, 16
    %v514 = vcvt.s32.f32 %v512
    %v515 = vcvt.s32.f32 %v513
    %516 = vmin.xlane.f32.xlu0 %v515
    %v517 = vpop.xlane.xlu0 %516
    %vm518 = vcmp.eq.f32.partialorder %v515, %v517
    %v519 = vsel %vm518, %v514, inf
    %520 = vmin.xlane.f32.xlu0 %v519
    %v521 = vpop.xlane.xlu0 %520
    %v522 = vcvt.f32.s32 %v521
    %v523 = vcvt.f32.s32 %v517
    %v524 = vshll.u32 %v523, 16
    %v525 = vadd.s32 %v524, %v522
    %vm526 = vcmp.eq.s32.totalorder %v443, %v525
    %v527 = vsel %vm526, 1, 0
    %v528 = vcvt.s32.f32 %v527
    %v529 = vpack.c.bf16 %v528, %v528
    %530 = vmatpush.bf16.msra.mxu0 0
    %531 = vmatpush.bf16.msra.mxu0 0
    %532 = vmatpush.bf16.msra.mxu0 0
    %533 = vmatpush.bf16.msra.mxu0 0
    %534 = vmatpush.bf16.msra.mxu0 0
    %535 = vmatpush.bf16.msra.mxu0 0
    %536 = vmatpush.bf16.msra.mxu0 %v455
    %537 = vmatpush.bf16.msra.mxu0 %v454
    %538 = vmatmul.bf16.gmra.mxu0 %v490
    %v539 = vpop.f32.mrf.mxu0
    %v540 = vadd.f32 0.0, %v539
    %v541 = vpop.f32.mrf.mxu0
    %542 = vdwg.mxu0
    %v547 = vunpack.c.l.b16 %v429
    %v548 = vunpack.c.l.b16 %v430
    %v549 = vunpack.c.l.b16 %v431
    %v550 = vunpack.c.l.b16 %v432
    %v551 = vpack.c.b16 %v548, %v547
    %v552 = vpack.c.b16 %v550, %v549
    %v556 = vsel %vm239, %v529, 0
    %558 = vmatpush.bf16.msra.mxu0 0
    %559 = vmatpush.bf16.msra.mxu0 0
    %560 = vmatpush.bf16.msra.mxu0 0
    %561 = vmatpush.bf16.msra.mxu0 0
    %562 = vmatpush.bf16.msra.mxu0 0
    %563 = vmatpush.bf16.msra.mxu0 0
    %564 = vmatpush.bf16.msra.mxu0 %v552
    %565 = vmatpush.bf16.msra.mxu0 %v551
    %566 = vmatmul.bf16.gmra.mxu0 %v556
    %v567 = vpop.f32.mrf.mxu0
    %v568 = vadd.f32 %v540, %v567
    %v569 = vpop.f32.mrf.mxu0
    %570 = vdwg.mxu0
    %v571 = vtanh.pop %v568
    %v572 = vpack.c.bf16 %v571, %v571
    %v574 = vsel %vm239, %v572, 0
    %576 = vmatpush.bf16.msra.mxu0 0
    %577 = vmatpush.bf16.msra.mxu0 0
    %578 = vmatpush.bf16.msra.mxu0 0
    %579 = vmatpush.bf16.msra.mxu0 0
    %580 = vmatpush.bf16.msra.mxu0 0
    %581 = vmatpush.bf16.msra.mxu0 0
    %582 = vmatpush.bf16.msra.mxu0 %v486
    %583 = vmatpush.bf16.msra.mxu0 %v485
    %584 = vmatmul.bf16.gmra.mxu0 %v574
    %v585 = vpop.f32.mrf.mxu0
    %v586 = vadd.f32 %v441, %v585
    %v587 = vpop.f32.mrf.mxu0
    %588 = vdwg.mxu0
    %s589 = scalar_lea.vmem [#allocation14], 8
    %590 = vst.msk [vmem:[%s589] sm:$0xff] %vm239, %v586
    %v591 = vsel %vm239, %v586, -inf
    %592 = vmax.xlane.f32.xlu0 %v591
    %v593 = vpop.xlane.xlu0 %592
    %vm594 = vcmp.eq.f32.partialorder %v586, %v593
    %v595 = vsel %vm594, %v443, 32
    %v596 = vsel %vm239, %v595, 2147483647
    %v597 = vand.u32 %v596, 65535
    %v598 = vshra.s32 %v596, 16
    %v599 = vcvt.s32.f32 %v597
    %v600 = vcvt.s32.f32 %v598
    %601 = vmin.xlane.f32.xlu0 %v600
    %v602 = vpop.xlane.xlu0 %601
    %vm603 = vcmp.eq.f32.partialorder %v600, %v602
    %v604 = vsel %vm603, %v599, inf
    %605 = vmin.xlane.f32.xlu0 %v604
    %v606 = vpop.xlane.xlu0 %605
    %v607 = vcvt.f32.s32 %v606
    %v608 = vcvt.f32.s32 %v602
    %v609 = vshll.u32 %v608, 16
    %v610 = vadd.s32 %v609, %v607
    %vm611 = vcmp.eq.s32.totalorder %v443, %v610
    %v612 = vsel %vm611, 1, 0
    %v613 = vcvt.s32.f32 %v612
    %v614 = vpack.c.bf16 %v613, %v613
    %615 = vmatpush.bf16.msra.mxu0 0
    %616 = vmatpush.bf16.msra.mxu0 0
    %617 = vmatpush.bf16.msra.mxu0 0
    %618 = vmatpush.bf16.msra.mxu0 0
    %619 = vmatpush.bf16.msra.mxu0 0
    %620 = vmatpush.bf16.msra.mxu0 0
    %621 = vmatpush.bf16.msra.mxu0 %v455
    %622 = vmatpush.bf16.msra.mxu0 %v454
    %623 = vmatmul.bf16.gmra.mxu0 %v574
    %v624 = vpop.f32.mrf.mxu0
    %v625 = vadd.f32 0.0, %v624
    %v626 = vpop.f32.mrf.mxu0
    %627 = vdwg.mxu0
    %v629 = vsel %vm239, %v614, 0
    %631 = vmatpush.bf16.msra.mxu0 0
    %632 = vmatpush.bf16.msra.mxu0 0
    %633 = vmatpush.bf16.msra.mxu0 0
    %634 = vmatpush.bf16.msra.mxu0 0
    %635 = vmatpush.bf16.msra.mxu0 0
    %636 = vmatpush.bf16.msra.mxu0 0
    %637 = vmatpush.bf16.msra.mxu0 %v552
    %638 = vmatpush.bf16.msra.mxu0 %v551
    %639 = vmatmul.bf16.gmra.mxu0 %v629
    %v640 = vpop.f32.mrf.mxu0
    %v641 = vadd.f32 %v625, %v640
    %v642 = vpop.f32.mrf.mxu0
    %643 = vdwg.mxu0
    %v644 = vtanh.pop %v641
    %v645 = vpack.c.bf16 %v644, %v644
    %v647 = vsel %vm239, %v645, 0
    %649 = vmatpush.bf16.msra.mxu0 0
    %650 = vmatpush.bf16.msra.mxu0 0
    %651 = vmatpush.bf16.msra.mxu0 0
    %652 = vmatpush.bf16.msra.mxu0 0
    %653 = vmatpush.bf16.msra.mxu0 0
    %654 = vmatpush.bf16.msra.mxu0 0
    %655 = vmatpush.bf16.msra.mxu0 %v486
    %656 = vmatpush.bf16.msra.mxu0 %v485
    %657 = vmatmul.bf16.gmra.mxu0 %v647
    %v658 = vpop.f32.mrf.mxu0
    %v659 = vadd.f32 %v441, %v658
    %v660 = vpop.f32.mrf.mxu0
    %661 = vdwg.mxu0
    %s662 = scalar_lea.vmem [#allocation14], 16
    %663 = vst.msk [vmem:[%s662] sm:$0xff] %vm239, %v659
    %v664 = vsel %vm239, %v659, -inf
    %665 = vmax.xlane.f32.xlu0 %v664
    %v666 = vpop.xlane.xlu0 %665
    %vm667 = vcmp.eq.f32.partialorder %v659, %v666
    %v668 = vsel %vm667, %v443, 32
    %v669 = vsel %vm239, %v668, 2147483647
    %v670 = vand.u32 %v669, 65535
    %v671 = vshra.s32 %v669, 16
    %v672 = vcvt.s32.f32 %v670
    %v673 = vcvt.s32.f32 %v671
    %674 = vmin.xlane.f32.xlu0 %v673
    %v675 = vpop.xlane.xlu0 %674
    %vm676 = vcmp.eq.f32.partialorder %v673, %v675
    %v677 = vsel %vm676, %v672, inf
    %678 = vmin.xlane.f32.xlu0 %v677
    %v679 = vpop.xlane.xlu0 %678
    %v680 = vcvt.f32.s32 %v679
    %v681 = vcvt.f32.s32 %v675
    %v682 = vshll.u32 %v681, 16
    %v683 = vadd.s32 %v682, %v680
    %vm684 = vcmp.eq.s32.totalorder %v443, %v683
    %v685 = vsel %vm684, 1, 0
    %v686 = vcvt.s32.f32 %v685
    %v687 = vpack.c.bf16 %v686, %v686
    %688 = vmatpush.bf16.msra.mxu0 0
    %689 = vmatpush.bf16.msra.mxu0 0
    %690 = vmatpush.bf16.msra.mxu0 0
    %691 = vmatpush.bf16.msra.mxu0 0
    %692 = vmatpush.bf16.msra.mxu0 0
    %693 = vmatpush.bf16.msra.mxu0 0
    %694 = vmatpush.bf16.msra.mxu0 %v455
    %695 = vmatpush.bf16.msra.mxu0 %v454
    %696 = vmatmul.bf16.gmra.mxu0 %v647
    %v697 = vpop.f32.mrf.mxu0
    %v698 = vadd.f32 0.0, %v697
    %v699 = vpop.f32.mrf.mxu0
    %700 = vdwg.mxu0
    %v702 = vsel %vm239, %v687, 0
    %704 = vmatpush.bf16.msra.mxu0 0
    %705 = vmatpush.bf16.msra.mxu0 0
    %706 = vmatpush.bf16.msra.mxu0 0
    %707 = vmatpush.bf16.msra.mxu0 0
    %708 = vmatpush.bf16.msra.mxu0 0
    %709 = vmatpush.bf16.msra.mxu0 0
    %710 = vmatpush.bf16.msra.mxu0 %v552
    %711 = vmatpush.bf16.msra.mxu0 %v551
    %712 = vmatmul.bf16.gmra.mxu0 %v702
    %v713 = vpop.f32.mrf.mxu0
    %v714 = vadd.f32 %v698, %v713
    %v715 = vpop.f32.mrf.mxu0
    %716 = vdwg.mxu0
    %v717 = vtanh.pop %v714
    %v718 = vpack.c.bf16 %v717, %v717
    %v720 = vsel %vm239, %v718, 0
    %722 = vmatpush.bf16.msra.mxu0 0
    %723 = vmatpush.bf16.msra.mxu0 0
    %724 = vmatpush.bf16.msra.mxu0 0
    %725 = vmatpush.bf16.msra.mxu0 0
    %726 = vmatpush.bf16.msra.mxu0 0
    %727 = vmatpush.bf16.msra.mxu0 0
    %728 = vmatpush.bf16.msra.mxu0 %v486
    %729 = vmatpush.bf16.msra.mxu0 %v485
    %730 = vmatmul.bf16.gmra.mxu0 %v720
    %v731 = vpop.f32.mrf.mxu0
    %v732 = vadd.f32 %v441, %v731
    %v733 = vpop.f32.mrf.mxu0
    %734 = vdwg.mxu0
    %s735 = scalar_lea.vmem [#allocation14], 24
    %736 = vst.msk [vmem:[%s735] sm:$0xff] %vm239, %v732
    %v737 = vsel %vm239, %v732, -inf
    %738 = vmax.xlane.f32.xlu0 %v737
    %v739 = vpop.xlane.xlu0 %738
    %vm740 = vcmp.eq.f32.partialorder %v732, %v739
    %v741 = vsel %vm740, %v443, 32
    %v742 = vsel %vm239, %v741, 2147483647
    %v743 = vand.u32 %v742, 65535
    %v744 = vshra.s32 %v742, 16
    %v745 = vcvt.s32.f32 %v743
    %v746 = vcvt.s32.f32 %v744
    %747 = vmin.xlane.f32.xlu0 %v746
    %v748 = vpop.xlane.xlu0 %747
    %vm749 = vcmp.eq.f32.partialorder %v746, %v748
    %v750 = vsel %vm749, %v745, inf
    %751 = vmin.xlane.f32.xlu0 %v750
    %v752 = vpop.xlane.xlu0 %751
    %v753 = vcvt.f32.s32 %v752
    %v754 = vcvt.f32.s32 %v748
    %v755 = vshll.u32 %v754, 16
    %v756 = vadd.s32 %v755, %v753
    %vm757 = vcmp.eq.s32.totalorder %v443, %v756
    %v758 = vsel %vm757, 1, 0
    %v759 = vcvt.s32.f32 %v758
    %v760 = vpack.c.bf16 %v759, %v759
    %761 = vmatpush.bf16.msra.mxu0 0
    %762 = vmatpush.bf16.msra.mxu0 0
    %763 = vmatpush.bf16.msra.mxu0 0
    %764 = vmatpush.bf16.msra.mxu0 0
    %765 = vmatpush.bf16.msra.mxu0 0
    %766 = vmatpush.bf16.msra.mxu0 0
    %767 = vmatpush.bf16.msra.mxu0 %v455
    %768 = vmatpush.bf16.msra.mxu0 %v454
    %769 = vmatmul.bf16.gmra.mxu0 %v720
    %v770 = vpop.f32.mrf.mxu0
    %v771 = vadd.f32 0.0, %v770
    %v772 = vpop.f32.mrf.mxu0
    %773 = vdwg.mxu0
    %v775 = vsel %vm239, %v760, 0
    %777 = vmatpush.bf16.msra.mxu0 0
    %778 = vmatpush.bf16.msra.mxu0 0
    %779 = vmatpush.bf16.msra.mxu0 0
    %780 = vmatpush.bf16.msra.mxu0 0
    %781 = vmatpush.bf16.msra.mxu0 0
    %782 = vmatpush.bf16.msra.mxu0 0
    %783 = vmatpush.bf16.msra.mxu0 %v552
    %784 = vmatpush.bf16.msra.mxu0 %v551
    %785 = vmatmul.bf16.gmra.mxu0 %v775
    %v786 = vpop.f32.mrf.mxu0
    %v787 = vadd.f32 %v771, %v786
    %v788 = vpop.f32.mrf.mxu0
    %789 = vdwg.mxu0
    %v790 = vtanh.pop %v787
    %v791 = vpack.c.bf16 %v790, %v790
    %v793 = vsel %vm239, %v791, 0
    %795 = vmatpush.bf16.msra.mxu0 0
    %796 = vmatpush.bf16.msra.mxu0 0
    %797 = vmatpush.bf16.msra.mxu0 0
    %798 = vmatpush.bf16.msra.mxu0 0
    %799 = vmatpush.bf16.msra.mxu0 0
    %800 = vmatpush.bf16.msra.mxu0 0
    %801 = vmatpush.bf16.msra.mxu0 %v486
    %802 = vmatpush.bf16.msra.mxu0 %v485
    %803 = vmatmul.bf16.gmra.mxu0 %v793
    %v804 = vpop.f32.mrf.mxu0
    %v805 = vadd.f32 %v441, %v804
    %v806 = vpop.f32.mrf.mxu0
    %807 = vdwg.mxu0
    %s808 = scalar_lea.vmem [#allocation14], 32
    %809 = vst.msk [vmem:[%s808] sm:$0xff] %vm239, %v805
    %v810 = vsel %vm239, %v805, -inf
    %811 = vmax.xlane.f32.xlu0 %v810
    %v812 = vpop.xlane.xlu0 %811
    %vm813 = vcmp.eq.f32.partialorder %v805, %v812
    %v814 = vsel %vm813, %v443, 32
    %v815 = vsel %vm239, %v814, 2147483647
    %v816 = vand.u32 %v815, 65535
    %v817 = vshra.s32 %v815, 16
    %v818 = vcvt.s32.f32 %v816
    %v819 = vcvt.s32.f32 %v817
    %820 = vmin.xlane.f32.xlu0 %v819
    %v821 = vpop.xlane.xlu0 %820
    %vm822 = vcmp.eq.f32.partialorder %v819, %v821
    %v823 = vsel %vm822, %v818, inf
    %824 = vmin.xlane.f32.xlu0 %v823
    %v825 = vpop.xlane.xlu0 %824
    %v826 = vcvt.f32.s32 %v825
    %v827 = vcvt.f32.s32 %v821
    %v828 = vshll.u32 %v827, 16
    %v829 = vadd.s32 %v828, %v826
    %vm830 = vcmp.eq.s32.totalorder %v443, %v829
    %v831 = vsel %vm830, 1, 0
    %v832 = vcvt.s32.f32 %v831
    %v833 = vpack.c.bf16 %v832, %v832
    %834 = vmatpush.bf16.msra.mxu0 0
    %835 = vmatpush.bf16.msra.mxu0 0
    %836 = vmatpush.bf16.msra.mxu0 0
    %837 = vmatpush.bf16.msra.mxu0 0
    %838 = vmatpush.bf16.msra.mxu0 0
    %839 = vmatpush.bf16.msra.mxu0 0
    %840 = vmatpush.bf16.msra.mxu0 %v455
    %841 = vmatpush.bf16.msra.mxu0 %v454
    %842 = vmatmul.bf16.gmra.mxu0 %v793
    %v843 = vpop.f32.mrf.mxu0
    %v844 = vadd.f32 0.0, %v843
    %v845 = vpop.f32.mrf.mxu0
    %846 = vdwg.mxu0
    %v848 = vsel %vm239, %v833, 0
    %850 = vmatpush.bf16.msra.mxu0 0
    %851 = vmatpush.bf16.msra.mxu0 0
    %852 = vmatpush.bf16.msra.mxu0 0
    %853 = vmatpush.bf16.msra.mxu0 0
    %854 = vmatpush.bf16.msra.mxu0 0
    %855 = vmatpush.bf16.msra.mxu0 0
    %856 = vmatpush.bf16.msra.mxu0 %v552
    %857 = vmatpush.bf16.msra.mxu0 %v551
    %858 = vmatmul.bf16.gmra.mxu0 %v848
    %v859 = vpop.f32.mrf.mxu0
    %v860 = vadd.f32 %v844, %v859
    %v861 = vpop.f32.mrf.mxu0
    %862 = vdwg.mxu0
    %v863 = vtanh.pop %v860
    %v864 = vpack.c.bf16 %v863, %v863
    %v866 = vsel %vm239, %v864, 0
    %868 = vmatpush.bf16.msra.mxu0 0
    %869 = vmatpush.bf16.msra.mxu0 0
    %870 = vmatpush.bf16.msra.mxu0 0
    %871 = vmatpush.bf16.msra.mxu0 0
    %872 = vmatpush.bf16.msra.mxu0 0
    %873 = vmatpush.bf16.msra.mxu0 0
    %874 = vmatpush.bf16.msra.mxu0 %v486
    %875 = vmatpush.bf16.msra.mxu0 %v485
    %876 = vmatmul.bf16.gmra.mxu0 %v866
    %v877 = vpop.f32.mrf.mxu0
    %v878 = vadd.f32 %v441, %v877
    %v879 = vpop.f32.mrf.mxu0
    %880 = vdwg.mxu0
    %s881 = scalar_lea.vmem [#allocation14], 40
    %882 = vst.msk [vmem:[%s881] sm:$0xff] %vm239, %v878
    %v883 = vsel %vm239, %v878, -inf
    %884 = vmax.xlane.f32.xlu0 %v883
    %v885 = vpop.xlane.xlu0 %884
    %vm886 = vcmp.eq.f32.partialorder %v878, %v885
    %v887 = vsel %vm886, %v443, 32
    %v888 = vsel %vm239, %v887, 2147483647
    %v889 = vand.u32 %v888, 65535
    %v890 = vshra.s32 %v888, 16
    %v891 = vcvt.s32.f32 %v889
    %v892 = vcvt.s32.f32 %v890
    %893 = vmin.xlane.f32.xlu0 %v892
    %v894 = vpop.xlane.xlu0 %893
    %vm895 = vcmp.eq.f32.partialorder %v892, %v894
    %v896 = vsel %vm895, %v891, inf
    %897 = vmin.xlane.f32.xlu0 %v896
    %v898 = vpop.xlane.xlu0 %897
    %v899 = vcvt.f32.s32 %v898
    %v900 = vcvt.f32.s32 %v894
    %v901 = vshll.u32 %v900, 16
    %v902 = vadd.s32 %v901, %v899
    %vm903 = vcmp.eq.s32.totalorder %v443, %v902
    %v904 = vsel %vm903, 1, 0
    %v905 = vcvt.s32.f32 %v904
    %v906 = vpack.c.bf16 %v905, %v905
    %907 = vmatpush.bf16.msra.mxu0 0
    %908 = vmatpush.bf16.msra.mxu0 0
    %909 = vmatpush.bf16.msra.mxu0 0
    %910 = vmatpush.bf16.msra.mxu0 0
    %911 = vmatpush.bf16.msra.mxu0 0
    %912 = vmatpush.bf16.msra.mxu0 0
    %913 = vmatpush.bf16.msra.mxu0 %v455
    %914 = vmatpush.bf16.msra.mxu0 %v454
    %915 = vmatmul.bf16.gmra.mxu0 %v866
    %v916 = vpop.f32.mrf.mxu0
    %v917 = vadd.f32 0.0, %v916
    %v918 = vpop.f32.mrf.mxu0
    %919 = vdwg.mxu0
    %v921 = vsel %vm239, %v906, 0
    %923 = vmatpush.bf16.msra.mxu0 0
    %924 = vmatpush.bf16.msra.mxu0 0
    %925 = vmatpush.bf16.msra.mxu0 0
    %926 = vmatpush.bf16.msra.mxu0 0
    %927 = vmatpush.bf16.msra.mxu0 0
    %928 = vmatpush.bf16.msra.mxu0 0
    %929 = vmatpush.bf16.msra.mxu0 %v552
    %930 = vmatpush.bf16.msra.mxu0 %v551
    %931 = vmatmul.bf16.gmra.mxu0 %v921
    %v932 = vpop.f32.mrf.mxu0
    %v933 = vadd.f32 %v917, %v932
    %v934 = vpop.f32.mrf.mxu0
    %935 = vdwg.mxu0
    %v936 = vtanh.pop %v933
    %v937 = vpack.c.bf16 %v936, %v936
    %v939 = vsel %vm239, %v937, 0
    %941 = vmatpush.bf16.msra.mxu0 0
    %942 = vmatpush.bf16.msra.mxu0 0
    %943 = vmatpush.bf16.msra.mxu0 0
    %944 = vmatpush.bf16.msra.mxu0 0
    %945 = vmatpush.bf16.msra.mxu0 0
    %946 = vmatpush.bf16.msra.mxu0 0
    %947 = vmatpush.bf16.msra.mxu0 %v486
    %948 = vmatpush.bf16.msra.mxu0 %v485
    %949 = vmatmul.bf16.gmra.mxu0 %v939
    %v950 = vpop.f32.mrf.mxu0
    %v951 = vadd.f32 %v441, %v950
    %v952 = vpop.f32.mrf.mxu0
    %953 = vdwg.mxu0
    %s954 = scalar_lea.vmem [#allocation14], 48
    %955 = vst.msk [vmem:[%s954] sm:$0xff] %vm239, %v951
    %v956 = vsel %vm239, %v951, -inf
    %957 = vmax.xlane.f32.xlu0 %v956
    %v958 = vpop.xlane.xlu0 %957
    %vm959 = vcmp.eq.f32.partialorder %v951, %v958
    %v960 = vsel %vm959, %v443, 32
    %v961 = vsel %vm239, %v960, 2147483647
    %v962 = vand.u32 %v961, 65535
    %v963 = vshra.s32 %v961, 16
    %v964 = vcvt.s32.f32 %v962
    %v965 = vcvt.s32.f32 %v963
    %966 = vmin.xlane.f32.xlu0 %v965
    %v967 = vpop.xlane.xlu0 %966
    %vm968 = vcmp.eq.f32.partialorder %v965, %v967
    %v969 = vsel %vm968, %v964, inf
    %970 = vmin.xlane.f32.xlu0 %v969
    %v971 = vpop.xlane.xlu0 %970
    %v972 = vcvt.f32.s32 %v971
    %v973 = vcvt.f32.s32 %v967
    %v974 = vshll.u32 %v973, 16
    %v975 = vadd.s32 %v974, %v972
    %vm976 = vcmp.eq.s32.totalorder %v443, %v975
    %v977 = vsel %vm976, 1, 0
    %v978 = vcvt.s32.f32 %v977
    %v979 = vpack.c.bf16 %v978, %v978
    %980 = vmatpush.bf16.msra.mxu0 0
    %981 = vmatpush.bf16.msra.mxu0 0
    %982 = vmatpush.bf16.msra.mxu0 0
    %983 = vmatpush.bf16.msra.mxu0 0
    %984 = vmatpush.bf16.msra.mxu0 0
    %985 = vmatpush.bf16.msra.mxu0 0
    %986 = vmatpush.bf16.msra.mxu0 %v455
    %987 = vmatpush.bf16.msra.mxu0 %v454
    %988 = vmatmul.bf16.gmra.mxu0 %v939
    %v989 = vpop.f32.mrf.mxu0
    %v990 = vadd.f32 0.0, %v989
    %v991 = vpop.f32.mrf.mxu0
    %992 = vdwg.mxu0
    %v994 = vsel %vm239, %v979, 0
    %996 = vmatpush.bf16.msra.mxu0 0
    %997 = vmatpush.bf16.msra.mxu0 0
    %998 = vmatpush.bf16.msra.mxu0 0
    %999 = vmatpush.bf16.msra.mxu0 0
    %1000 = vmatpush.bf16.msra.mxu0 0
    %1001 = vmatpush.bf16.msra.mxu0 0
    %1002 = vmatpush.bf16.msra.mxu0 %v552
    %1003 = vmatpush.bf16.msra.mxu0 %v551
    %1004 = vmatmul.bf16.gmra.mxu0 %v994
    %v1005 = vpop.f32.mrf.mxu0
    %v1006 = vadd.f32 %v990, %v1005
    %v1007 = vpop.f32.mrf.mxu0
    %1008 = vdwg.mxu0
    %v1009 = vtanh.pop %v1006
    %v1010 = vpack.c.bf16 %v1009, %v1009
    %v1012 = vsel %vm239, %v1010, 0
    %1014 = vmatpush.bf16.msra.mxu0 0
    %1015 = vmatpush.bf16.msra.mxu0 0
    %1016 = vmatpush.bf16.msra.mxu0 0
    %1017 = vmatpush.bf16.msra.mxu0 0
    %1018 = vmatpush.bf16.msra.mxu0 0
    %1019 = vmatpush.bf16.msra.mxu0 0
    %1020 = vmatpush.bf16.msra.mxu0 %v486
    %1021 = vmatpush.bf16.msra.mxu0 %v485
    %1022 = vmatmul.bf16.gmra.mxu0 %v1012
    %v1023 = vpop.f32.mrf.mxu0
    %v1024 = vadd.f32 %v441, %v1023
    %v1025 = vpop.f32.mrf.mxu0
    %1026 = vdwg.mxu0
    %s1027 = scalar_lea.vmem [#allocation14], 56
    %1028 = vst.msk [vmem:[%s1027] sm:$0xff] %vm239, %v1024
    // Predicated region
    $region74: #{tpu_custom_call.1} parent=1 // pred_check
      _
    $region75: #{tpu_custom_call.1} parent=1 // pred_check_branch
      %1030 = sbr.rel (0) target = $region77
    $region76: #{tpu_custom_call.1} parent=1 // pred_region
      %1032 = vsyncadd [#allocation4], 0
      %s1033 = sshll.u32 [#allocation14], 4
      %s1034 = int_to_ptr.vmem [resolvable:$true] %s1033
      %s1035 = sshll.u32 %s11, 4
      %s1036 = int_to_ptr.hbm [resolvable:$true] %s1035
      %1041 = dma.vmem_to_hbm [thread:$0]  %s1034, 1024, %s1036, [#allocation4], 128, 128, 8
    $region77: #{tpu_custom_call.1} parent=1 // pred_fallthru
      _
    // Predicated region
    $region78: #{tpu_custom_call.1} parent=1 // pred_check
      _
    $region79: #{tpu_custom_call.1} parent=1 // pred_check_branch
      %1043 = sbr.rel (0) target = $region81
    $region80: #{tpu_custom_call.1} parent=1 // pred_region
      %1045 = dma.done [#allocation4], 1024
    $region81: #{tpu_custom_call.1} parent=1 // pred_fallthru
      _
    %1046 = vsyncpa [#allocation3], 1
    %1047 = vsyncpa [#allocation6], 1
    %1048 = vsyncpa [#allocation9], 1
    %1049 = vsyncpa [#allocation12], 1
    %1050 = vsyncpa [#allocation4], 1

</llo_original>
